<compile_context>
chip_gen: v5e
topology: v5e:2x2
jax: 0.10.0
libtpu: 0.0.40
codegen_flags: <defaults>
</compile_context>

<pallas_src>
import functools

import jax
import jax.numpy as jnp
from jax.experimental import pallas as pl
from jax.experimental.pallas import tpu as pltpu

_LANE = 128


def _round_up(x, m):
    return ((x + m - 1) // m) * m


def _plan(n):
    """Pick padded node count and (tm, tk) tiles that divide it."""
    n_pad = _round_up(max(n, 1), _LANE)
    tm = 256 if n_pad % 256 == 0 else 128
    tk = 128
    for cand in (512, 256, 128):
        if n_pad % cand == 0:
            tk = cand
            break
    return n_pad, tm, tk


# ---------------------------------------------------------------------------
# Tiled aggregate + fused projection kernel:
#   out[i] = act( (sum_k A_hat[i, k] @ Z[k]) @ W + b )
# grid = (row tiles [parallel], k reduction [arbitrary])
# ---------------------------------------------------------------------------
def _agg_project_kernel(a_ref, z_ref, w_ref, b_ref, o_ref, acc_ref, *, apply_relu):
    @pl.when(pl.program_id(1) == 0)
    def _():
        acc_ref[...] = jnp.zeros_like(acc_ref)

    # bf16 x bf16 -> f32 accumulate on the MXU.
    acc_ref[...] += jnp.dot(
        a_ref[...], z_ref[...], preferred_element_type=jnp.float32
    )

    @pl.when(pl.program_id(1) == pl.num_programs(1) - 1)
    def _():
        y = (
            jnp.dot(
                acc_ref[...].astype(jnp.bfloat16),
                w_ref[...],
                preferred_element_type=jnp.float32,
            )
            + b_ref[...]
        )
        if apply_relu:
            y = jnp.maximum(y, 0.0)
        o_ref[...] = y


def _gcn_layer(a_bf16, z, w, b, *, apply_relu, tm, tk):
    """act(A_hat @ Z @ W + b); A_hat [Np,Np] bf16, Z [Np,Cp], W [Cp,Fp], b [1,Fp]."""
    n_pad = a_bf16.shape[0]
    c_pad = z.shape[1]
    f_pad = w.shape[1]

    z_bf16 = z.astype(jnp.bfloat16)
    w_bf16 = w.astype(jnp.bfloat16)
    b_f32 = b.astype(jnp.float32)

    grid = (n_pad // tm, n_pad // tk)
    kernel = functools.partial(_agg_project_kernel, apply_relu=apply_relu)

    return pl.pallas_call(
        kernel,
        out_shape=jax.ShapeDtypeStruct((n_pad, f_pad), jnp.float32),
        grid_spec=pltpu.PrefetchScalarGridSpec(
            num_scalar_prefetch=0,
            grid=grid,
            in_specs=[
                pl.BlockSpec((tm, tk), lambda i, k: (i, k)),        # A_hat tile
                pl.BlockSpec((tk, c_pad), lambda i, k: (k, 0)),     # Z k-tile
                pl.BlockSpec((c_pad, f_pad), lambda i, k: (0, 0)),  # W (resident)
                pl.BlockSpec((1, f_pad), lambda i, k: (0, 0)),      # bias
            ],
            out_specs=pl.BlockSpec((tm, f_pad), lambda i, k: (i, 0)),
            scratch_shapes=[pltpu.VMEM((tm, c_pad), jnp.float32)],
        ),
        compiler_params=pltpu.CompilerParams(
            dimension_semantics=("parallel", "arbitrary"),
            vmem_limit_bytes=32 * 1024 * 1024,
        ),
    )(a_bf16, z_bf16, w_bf16, b_f32)


def gcn_clustering(a_hat, x, w1, b1, w2, b2):
    """out = GCN2(relu(GCN1(x)));  a_hat is the dense normalized adjacency."""
    n, c_in = x.shape
    hidden = w1.shape[1]
    out_channels = w2.shape[1]
    n_pad, tm, tk = _plan(n)

    cin_p = _round_up(max(c_in, _LANE), _LANE)
    hid_p = _round_up(max(hidden, _LANE), _LANE)
    out_p = _round_up(max(out_channels, _LANE), _LANE)

    def pad2(m, rows, cols):
        return jnp.pad(m, ((0, rows - m.shape[0]), (0, cols - m.shape[1])))

    a_p = pad2(a_hat, n_pad, n_pad).astype(jnp.bfloat16)
    x_p = pad2(x, n_pad, cin_p)
    w1_p = pad2(w1, cin_p, hid_p)
    b1_p = pad2(b1.reshape(1, -1), 1, hid_p)
    w2_p = pad2(w2, hid_p, out_p)
    b2_p = pad2(b2.reshape(1, -1), 1, out_p)

    # Layer 1: H = relu(A_hat @ X @ W1 + b1)   (padded rows/cols are inert)
    h = _gcn_layer(a_p, x_p, w1_p, b1_p, apply_relu=True, tm=tm, tk=tk)
    # Layer 2: out = A_hat @ H @ W2 + b2
    out = _gcn_layer(a_p, h, w2_p, b2_p, apply_relu=False, tm=tm, tk=tk)
    return out[:n, :out_channels]


def build_normalized_adjacency(edge_index, num_nodes):
    """Dense D^{-1/2}(A+I)D^{-1/2}, exactly torch_geometric's gcn_norm
    (add_self_loops=True, edge_weight=1, deg from the col axis)."""
    row, col = edge_index[0], edge_index[1]
    loops = jnp.arange(num_nodes, dtype=edge_index.dtype)
    row = jnp.concatenate([row, loops])
    col = jnp.concatenate([col, loops])
    # A[c, r] accumulates edge weight for message r -> c so aggregation is A @ X.
    a = jnp.zeros((num_nodes, num_nodes), dtype=jnp.float32)
    a = a.at[col, row].add(1.0)
    deg = a.sum(axis=1)  # scatter_add(edge_weight, col)
    deg_inv_sqrt = jnp.where(deg > 0, jax.lax.rsqrt(deg), 0.0)
    return deg_inv_sqrt[:, None] * a * deg_inv_sqrt[None, :]


if __name__ == "__main__":
    key = jax.random.PRNGKey(0)
    k_x, k_e, k_w1, k_b1, k_w2, k_b2 = jax.random.split(key, 6)

    # Small but non-trivial: exercises a (5, 5) grid (row-parallel + k-reduction).
    num_nodes = 600
    in_channels = 8
    hidden = 64
    out_channels = 4
    num_edges = 2400

    x = jax.random.normal(k_x, (num_nodes, in_channels), dtype=jnp.float32)
    edge_index = jax.random.randint(
        k_e, (2, num_edges), minval=0, maxval=num_nodes, dtype=jnp.int32
    )

    # GCNConv(in, 64) and GCNConv(64, out) parameters (synthetic, deterministic).
    w1 = jax.random.normal(k_w1, (in_channels, hidden), dtype=jnp.float32) * 0.1
    b1 = jax.random.normal(k_b1, (hidden,), dtype=jnp.float32) * 0.1
    w2 = jax.random.normal(k_w2, (hidden, out_channels), dtype=jnp.float32) * 0.1
    b2 = jax.random.normal(k_b2, (out_channels,), dtype=jnp.float32) * 0.1

    a_hat = build_normalized_adjacency(edge_index, num_nodes)

    out = jax.jit(gcn_clustering)(a_hat, x, w1, b1, w2, b2)
    out = jax.block_until_ready(out)

    # pure-JAX f32 reference (bf16 MXU operands in the kernel -> loose tolerance)
    h_ref = jnp.maximum(a_hat @ (x @ w1) + b1[None, :], 0.0)
    out_ref = a_hat @ (h_ref @ w2) + b2[None, :]

    assert out.shape == (num_nodes, out_channels)
    max_err = float(jnp.max(jnp.abs(out - out_ref)))
    assert jnp.allclose(out, out_ref, atol=2e-2, rtol=2e-2), (
        f"mismatch vs reference, max abs err = {max_err}"
    )

    print("KERNEL_OK")
</pallas_src>

<mosaic_0001>
module attributes {stable_mosaic.version = 11 : i64} {
  func.func @_agg_project_kernel(%arg0: i32, %arg1: i32, %arg2: memref<128x128xbf16, #tpu.memory_space<vmem>>, %arg3: memref<128x128xbf16, #tpu.memory_space<vmem>>, %arg4: memref<128x128xbf16, #tpu.memory_space<vmem>>, %arg5: memref<1x128xf32, #tpu.memory_space<vmem>>, %arg6: memref<128x128xf32, #tpu.memory_space<vmem>>, %arg7: memref<128x128xf32, #tpu.memory_space<vmem>>) attributes {dimension_semantics = [#tpu.dimension_semantics<parallel>, #tpu.dimension_semantics<arbitrary>], iteration_bounds = array<i64: 5, 5>, scalar_prefetch = 0 : i64, scratch_operands = 1 : i64, tpu.core_type = #tpu.core_type<tc>, window_params = [{transform_indices = @transform_0, window_bounds = array<i64: 128, 128>}, {transform_indices = @transform_1, window_bounds = array<i64: 128, 128>}, {pipeline_mode = #tpu.pipeline_mode<synchronous>, transform_indices = @transform_2, window_bounds = array<i64: 128, 128>}, {pipeline_mode = #tpu.pipeline_mode<synchronous>, transform_indices = @transform_3, window_bounds = array<i64: 1, 128>}, {transform_indices = @transform_4, window_bounds = array<i64: 128, 128>}]} {
    %c0_i32 = arith.constant 0 : i32
    %0 = arith.cmpi eq, %arg1, %c0_i32 : i32
    %1 = arith.extui %0 : i1 to i32
    %c0_i32_0 = arith.constant 0 : i32
    %2 = arith.cmpi ne, %1, %c0_i32_0 : i32
    scf.if %2 {
      %cst_9 = arith.constant 0.000000e+00 : f32
      %12 = vector.broadcast %cst_9 : f32 to vector<128x128xf32>
      %c0_10 = arith.constant 0 : index
      %c0_11 = arith.constant 0 : index
      %13 = vector.load %arg7[%c0_10, %c0_11] : memref<128x128xf32, #tpu.memory_space<vmem>>, vector<128x128xf32>
      tpu.vector_store %arg7[%c0_10, %c0_11], %12 {strides = array<i32>} : memref<128x128xf32, #tpu.memory_space<vmem>>, vector<128x128xf32>,
    } else {
    }
    %c0 = arith.constant 0 : index
    %c0_1 = arith.constant 0 : index
    %3 = vector.load %arg7[%c0, %c0_1] : memref<128x128xf32, #tpu.memory_space<vmem>>, vector<128x128xf32>
    %c0_2 = arith.constant 0 : index
    %c0_3 = arith.constant 0 : index
    %4 = vector.load %arg2[%c0_2, %c0_3] : memref<128x128xbf16, #tpu.memory_space<vmem>>, vector<128x128xbf16>
    %c0_4 = arith.constant 0 : index
    %c0_5 = arith.constant 0 : index
    %5 = vector.load %arg3[%c0_4, %c0_5] : memref<128x128xbf16, #tpu.memory_space<vmem>>, vector<128x128xbf16>
    %cst = arith.constant dense<0.000000e+00> : vector<128x128xf32>
    %6 = tpu.matmul %4, %5, %cst {dimension_numbers = #tpu.dot_dimension_numbers<[1], [0], [0], [1], [0, 0, 1, 1], [], []>} : vector<128x128xbf16>, vector<128x128xbf16>, vector<128x128xf32> -> vector<128x128xf32>
    %7 = arith.addf %3, %6 : vector<128x128xf32>
    %c0_6 = arith.constant 0 : index
    %c0_7 = arith.constant 0 : index
    %8 = vector.load %arg7[%c0_6, %c0_7] : memref<128x128xf32, #tpu.memory_space<vmem>>, vector<128x128xf32>
    tpu.vector_store %arg7[%c0_6, %c0_7], %7 {strides = array<i32>} : memref<128x128xf32, #tpu.memory_space<vmem>>, vector<128x128xf32>,
    %c4_i32 = arith.constant 4 : i32
    %9 = arith.cmpi eq, %arg1, %c4_i32 : i32
    %10 = arith.extui %9 : i1 to i32
    %c0_i32_8 = arith.constant 0 : i32
    %11 = arith.cmpi ne, %10, %c0_i32_8 : i32
    scf.if %11 {
      %c0_9 = arith.constant 0 : index
      %c0_10 = arith.constant 0 : index
      %12 = vector.load %arg7[%c0_9, %c0_10] : memref<128x128xf32, #tpu.memory_space<vmem>>, vector<128x128xf32>
      %13 = arith.truncf %12 : vector<128x128xf32> to vector<128x128xbf16>
      %c0_11 = arith.constant 0 : index
      %c0_12 = arith.constant 0 : index
      %14 = vector.load %arg4[%c0_11, %c0_12] : memref<128x128xbf16, #tpu.memory_space<vmem>>, vector<128x128xbf16>
      %cst_13 = arith.constant dense<0.000000e+00> : vector<128x128xf32>
      %15 = tpu.matmul %13, %14, %cst_13 {dimension_numbers = #tpu.dot_dimension_numbers<[1], [0], [0], [1], [0, 0, 1, 1], [], []>} : vector<128x128xbf16>, vector<128x128xbf16>, vector<128x128xf32> -> vector<128x128xf32>
      %c0_14 = arith.constant 0 : index
      %c0_15 = arith.constant 0 : index
      %16 = vector.load %arg5[%c0_14, %c0_15] : memref<1x128xf32, #tpu.memory_space<vmem>>, vector<1x128xf32>
      %17 = vector.broadcast %16 : vector<1x128xf32> to vector<128x128xf32>
      %18 = arith.addf %15, %17 : vector<128x128xf32>
      %cst_16 = arith.constant 0.000000e+00 : f32
      %19 = vector.broadcast %cst_16 : f32 to vector<128x128xf32>
      %20 = arith.maximumf %18, %19 : vector<128x128xf32>
      %c0_17 = arith.constant 0 : index
      %c0_18 = arith.constant 0 : index
      %21 = vector.load %arg6[%c0_17, %c0_18] : memref<128x128xf32, #tpu.memory_space<vmem>>, vector<128x128xf32>
      tpu.vector_store %arg6[%c0_17, %c0_18], %20 {strides = array<i32>} : memref<128x128xf32, #tpu.memory_space<vmem>>, vector<128x128xf32>,
    } else {
    }
    return
  }
  func.func @transform_0(%arg0: i32, %arg1: i32) -> (i32, i32) {
    %c0_i32 = arith.constant 0 : i32
    return %arg0, %arg1 : i32, i32
  }
  func.func @transform_1(%arg0: i32, %arg1: i32) -> (i32, i32) {
    %c0_i32 = arith.constant 0 : i32
    %c0_i32_0 = arith.constant 0 : i32
    return %arg1, %c0_i32 : i32, i32
  }
  func.func @transform_2(%arg0: i32, %arg1: i32) -> (i32, i32) {
    %c0_i32 = arith.constant 0 : i32
    %c0_i32_0 = arith.constant 0 : i32
    %c0_i32_1 = arith.constant 0 : i32
    return %c0_i32, %c0_i32_0 : i32, i32
  }
  func.func @transform_3(%arg0: i32, %arg1: i32) -> (i32, i32) {
    %c0_i32 = arith.constant 0 : i32
    %c0_i32_0 = arith.constant 0 : i32
    %c0_i32_1 = arith.constant 0 : i32
    return %c0_i32, %c0_i32_0 : i32, i32
  }
  func.func @transform_4(%arg0: i32, %arg1: i32) -> (i32, i32) {
    %c0_i32 = arith.constant 0 : i32
    %c0_i32_0 = arith.constant 0 : i32
    return %arg0, %c0_i32 : i32, i32
  }
}

module attributes {stable_mosaic.version = 11 : i64} {
  func.func @_agg_project_kernel(%arg0: i32, %arg1: i32, %arg2: memref<128x128xbf16, #tpu.memory_space<vmem>>, %arg3: memref<128x128xbf16, #tpu.memory_space<vmem>>, %arg4: memref<128x128xbf16, #tpu.memory_space<vmem>>, %arg5: memref<1x128xf32, #tpu.memory_space<vmem>>, %arg6: memref<128x128xf32, #tpu.memory_space<vmem>>, %arg7: memref<128x128xf32, #tpu.memory_space<vmem>>) attributes {dimension_semantics = [#tpu.dimension_semantics<parallel>, #tpu.dimension_semantics<arbitrary>], iteration_bounds = array<i64: 5, 5>, scalar_prefetch = 0 : i64, scratch_operands = 1 : i64, tpu.core_type = #tpu.core_type<tc>, window_params = [{transform_indices = @transform_0, window_bounds = array<i64: 128, 128>}, {transform_indices = @transform_1, window_bounds = array<i64: 128, 128>}, {pipeline_mode = #tpu.pipeline_mode<synchronous>, transform_indices = @transform_2, window_bounds = array<i64: 128, 128>}, {pipeline_mode = #tpu.pipeline_mode<synchronous>, transform_indices = @transform_3, window_bounds = array<i64: 1, 128>}, {transform_indices = @transform_4, window_bounds = array<i64: 128, 128>}]} {
    %c0_i32 = arith.constant 0 : i32
    %0 = arith.cmpi eq, %arg1, %c0_i32 : i32
    %1 = arith.extui %0 : i1 to i32
    %c0_i32_0 = arith.constant 0 : i32
    %2 = arith.cmpi ne, %1, %c0_i32_0 : i32
    scf.if %2 {
      %cst_9 = arith.constant 0.000000e+00 : f32
      %12 = vector.broadcast %cst_9 : f32 to vector<128x128xf32>
      %c0_10 = arith.constant 0 : index
      %c0_11 = arith.constant 0 : index
      %13 = vector.load %arg7[%c0_10, %c0_11] : memref<128x128xf32, #tpu.memory_space<vmem>>, vector<128x128xf32>
      tpu.vector_store %arg7[%c0_10, %c0_11], %12 {strides = array<i32>} : memref<128x128xf32, #tpu.memory_space<vmem>>, vector<128x128xf32>,
    } else {
    }
    %c0 = arith.constant 0 : index
    %c0_1 = arith.constant 0 : index
    %3 = vector.load %arg7[%c0, %c0_1] : memref<128x128xf32, #tpu.memory_space<vmem>>, vector<128x128xf32>
    %c0_2 = arith.constant 0 : index
    %c0_3 = arith.constant 0 : index
    %4 = vector.load %arg2[%c0_2, %c0_3] : memref<128x128xbf16, #tpu.memory_space<vmem>>, vector<128x128xbf16>
    %c0_4 = arith.constant 0 : index
    %c0_5 = arith.constant 0 : index
    %5 = vector.load %arg3[%c0_4, %c0_5] : memref<128x128xbf16, #tpu.memory_space<vmem>>, vector<128x128xbf16>
    %cst = arith.constant dense<0.000000e+00> : vector<128x128xf32>
    %6 = tpu.matmul %4, %5, %cst {dimension_numbers = #tpu.dot_dimension_numbers<[1], [0], [0], [1], [0, 0, 1, 1], [], []>} : vector<128x128xbf16>, vector<128x128xbf16>, vector<128x128xf32> -> vector<128x128xf32>
    %7 = arith.addf %3, %6 : vector<128x128xf32>
    %c0_6 = arith.constant 0 : index
    %c0_7 = arith.constant 0 : index
    %8 = vector.load %arg7[%c0_6, %c0_7] : memref<128x128xf32, #tpu.memory_space<vmem>>, vector<128x128xf32>
    tpu.vector_store %arg7[%c0_6, %c0_7], %7 {strides = array<i32>} : memref<128x128xf32, #tpu.memory_space<vmem>>, vector<128x128xf32>,
    %c4_i32 = arith.constant 4 : i32
    %9 = arith.cmpi eq, %arg1, %c4_i32 : i32
    %10 = arith.extui %9 : i1 to i32
    %c0_i32_8 = arith.constant 0 : i32
    %11 = arith.cmpi ne, %10, %c0_i32_8 : i32
    scf.if %11 {
      %c0_9 = arith.constant 0 : index
      %c0_10 = arith.constant 0 : index
      %12 = vector.load %arg7[%c0_9, %c0_10] : memref<128x128xf32, #tpu.memory_space<vmem>>, vector<128x128xf32>
      %13 = arith.truncf %12 : vector<128x128xf32> to vector<128x128xbf16>
      %c0_11 = arith.constant 0 : index
      %c0_12 = arith.constant 0 : index
      %14 = vector.load %arg4[%c0_11, %c0_12] : memref<128x128xbf16, #tpu.memory_space<vmem>>, vector<128x128xbf16>
      %cst_13 = arith.constant dense<0.000000e+00> : vector<128x128xf32>
      %15 = tpu.matmul %13, %14, %cst_13 {dimension_numbers = #tpu.dot_dimension_numbers<[1], [0], [0], [1], [0, 0, 1, 1], [], []>} : vector<128x128xbf16>, vector<128x128xbf16>, vector<128x128xf32> -> vector<128x128xf32>
      %c0_14 = arith.constant 0 : index
      %c0_15 = arith.constant 0 : index
      %16 = vector.load %arg5[%c0_14, %c0_15] : memref<1x128xf32, #tpu.memory_space<vmem>>, vector<1x128xf32>
      %17 = vector.broadcast %16 : vector<1x128xf32> to vector<128x128xf32>
      %18 = arith.addf %15, %17 : vector<128x128xf32>
      %c0_16 = arith.constant 0 : index
      %c0_17 = arith.constant 0 : index
      %19 = vector.load %arg6[%c0_16, %c0_17] : memref<128x128xf32, #tpu.memory_space<vmem>>, vector<128x128xf32>
      tpu.vector_store %arg6[%c0_16, %c0_17], %18 {strides = array<i32>} : memref<128x128xf32, #tpu.memory_space<vmem>>, vector<128x128xf32>,
    } else {
    }
    return
  }
  func.func @transform_0(%arg0: i32, %arg1: i32) -> (i32, i32) {
    %c0_i32 = arith.constant 0 : i32
    return %arg0, %arg1 : i32, i32
  }
  func.func @transform_1(%arg0: i32, %arg1: i32) -> (i32, i32) {
    %c0_i32 = arith.constant 0 : i32
    %c0_i32_0 = arith.constant 0 : i32
    return %arg1, %c0_i32 : i32, i32
  }
  func.func @transform_2(%arg0: i32, %arg1: i32) -> (i32, i32) {
    %c0_i32 = arith.constant 0 : i32
    %c0_i32_0 = arith.constant 0 : i32
    %c0_i32_1 = arith.constant 0 : i32
    return %c0_i32, %c0_i32_0 : i32, i32
  }
  func.func @transform_3(%arg0: i32, %arg1: i32) -> (i32, i32) {
    %c0_i32 = arith.constant 0 : i32
    %c0_i32_0 = arith.constant 0 : i32
    %c0_i32_1 = arith.constant 0 : i32
    return %c0_i32, %c0_i32_0 : i32, i32
  }
  func.func @transform_4(%arg0: i32, %arg1: i32) -> (i32, i32) {
    %c0_i32 = arith.constant 0 : i32
    %c0_i32_0 = arith.constant 0 : i32
    return %arg0, %c0_i32 : i32, i32
  }
}

</mosaic_0001>

<llo_original>
// kernel: gcn_clustering.2
$region0: #{gcn_clustering.2}
  #allocation0 [shape = 'u32[]', space=smem, size = 0x4, offset = 0x4, fixed_abs, tag = 'smem constant byte address 0x4 - core index']
  #allocation1 [shape = 'u32[72,128]{1,0:T(1,128)}', space=vmem, size = 0x9000, scoped, tag = 'internal scratch']
  #allocation2 [shape = 'f32[128,128]{1,0:T(8,128)}', space=vmem, size = 0x10000, scoped, tag = 'scratch operand']
  %s0 = inlined_call_operand.vmem [shape: bf16[640,640], index: 0, kind: input, shape index: {}]
  %s1 = inlined_call_operand.vmem [shape: bf16[640,128], index: 1, kind: input, shape index: {}]
  %s2 = inlined_call_operand.vmem [shape: bf16[128,128], index: 2, kind: input, shape index: {}]
  %s3 = inlined_call_operand.vmem [shape: f32[1,128], index: 3, kind: input, shape index: {}]
  %s4 = inlined_call_operand.vmem [shape: f32[640,128], index: 4, kind: output, shape index: {}]
  %s5 = sld [smem:[#allocation0]]
  $region98: #{gcn_clustering.2} parent=0
    _
  %s7 = ssub.s32 1, %s5
  %s8 = scalar_select 0, %s7, %s5
  $region1: #{gcn_clustering.2} parent=0
    #allocation3 [shape = 'u8[65536]{0}', space=vmem, size = 0x10000, scoped, tag = 'input window, operand 0']
    loop: start=0, step=1, limit=27
    $region2: #{gcn_clustering.2} parent=1 // loop_pre_header
      _
    $region3: #{gcn_clustering.2} parent=1 // loop_header
      %s10 = sphi 0, %s14
      %p11 = scmp.ge.s32.totalorder %s10, 27
      %s17 = sphi 0, %s29
      %s18 = sphi 0, %s25
      %s19 = sphi 0, %s17
      %s20 = sphi 0, %s18
      %s21 = sphi 0, %s19
      %s22 = sphi 0, %s20
      %s34 = sphi 0, %s36
      %s37 = sphi 0, %s34
      %s38 = sphi 0, %s37
      %s54 = sphi 0, %s38
      %s60 = sphi 0, %s62
      %s63 = sphi 0, %s60
      %s64 = sphi 0, %s63
      %s80 = sphi 0, %s64
      %s84 = sphi 0, %s84
      %s86 = sphi 0, %s84
      %s87 = sphi 0, %s86
      %s101 = sphi 0, %s87
      %s105 = sphi 0, %s105
      %s107 = sphi 0, %s105
      %s108 = sphi 0, %s107
      %s122 = sphi 0, %s108
      %s128 = sphi 0, %s130
      %s131 = sphi 0, %s128
      %s132 = sphi 0, %s131
      %s148 = sphi 0, %s132
    $region4: #{gcn_clustering.2} parent=1 // loop_header_branch
      %13 = sbr.rel (%p11) target = $region8
    $region5: #{gcn_clustering.2} parent=1 // loop_body
      %s15 = ssub.s32 %s10, 1
      %s16 = ssub.s32 %s10, 2
      %s23 = sadd.s32 1, %s18
      %p24 = scmp.ge.s32.totalorder %s23, 5
      %s25 = scalar_select %p24, 0, %s23
      %s26 = sadd.s32 1, %s17
      %s27 = scalar_select %p24, %s26, %s17
      %p28 = scmp.ge.s32.totalorder %s27, 5
      %s29 = scalar_select %p28, 0, %s27
      %s30 = ssub.s32 %s17, %s29
      %s31 = ssub.s32 %s18, %s25
      %s32 = sor.u32 %s30, %s31
      %p33 = scmp.eq.s32.totalorder %s32, 0
      %s35 = sadd.s32 %s34, 1
      %s36 = scalar_select %p33, %s34, %s35
      %p39 = pneg %p33
      %p40 = scmp.eq.s32.totalorder %s10, 24
      %p41 = por %p39, %p40
      %p42 = scmp.ne.s32.totalorder %s34, %s37
      %p43 = scmp.eq.s32.totalorder %s10, 0
      %p44 = por %p42, %p43
      %p45 = scmp.ne.s32.totalorder %s34, %s37
      %p46 = scmp.eq.s32.totalorder %s15, 24
      %p47 = por %p45, %p46
      %p48 = scmp.ne.s32.totalorder %s37, %s38
      %p49 = scmp.eq.s32.totalorder %s15, 0
      %p50 = por %p48, %p49
      %p51 = scmp.ne.s32.totalorder %s37, %s38
      %p52 = scmp.eq.s32.totalorder %s16, 24
      %p53 = por %p51, %p52
      %p55 = scmp.ne.s32.totalorder %s38, %s54
      %p56 = scmp.eq.s32.totalorder %s16, 0
      %p57 = por %p55, %p56
      %s58 = ssub.s32 %s18, %s25
      %p59 = scmp.eq.s32.totalorder %s58, 0
      %s61 = sadd.s32 %s60, 1
      %s62 = scalar_select %p59, %s60, %s61
      %p65 = pneg %p59
      %p66 = scmp.eq.s32.totalorder %s10, 24
      %p67 = por %p65, %p66
      %p68 = scmp.ne.s32.totalorder %s60, %s63
      %p69 = scmp.eq.s32.totalorder %s10, 0
      %p70 = por %p68, %p69
      %p71 = scmp.ne.s32.totalorder %s60, %s63
      %p72 = scmp.eq.s32.totalorder %s15, 24
      %p73 = por %p71, %p72
      %p74 = scmp.ne.s32.totalorder %s63, %s64
      %p75 = scmp.eq.s32.totalorder %s15, 0
      %p76 = por %p74, %p75
      %p77 = scmp.ne.s32.totalorder %s63, %s64
      %p78 = scmp.eq.s32.totalorder %s16, 24
      %p79 = por %p77, %p78
      %p81 = scmp.ne.s32.totalorder %s64, %s80
      %p82 = scmp.eq.s32.totalorder %s16, 0
      %p83 = por %p81, %p82
      %s85 = sadd.s32 %s84, 1
      %p88 = scmp.eq.s32.totalorder %s10, 24
      %p89 = scmp.ne.s32.totalorder %s84, %s86
      %p90 = scmp.eq.s32.totalorder %s10, 0
      %p91 = por %p89, %p90
      %p92 = scmp.ne.s32.totalorder %s84, %s86
      %p93 = scmp.eq.s32.totalorder %s15, 24
      %p94 = por %p92, %p93
      %p95 = scmp.ne.s32.totalorder %s86, %s87
      %p96 = scmp.eq.s32.totalorder %s15, 0
      %p97 = por %p95, %p96
      %p98 = scmp.ne.s32.totalorder %s86, %s87
      %p99 = scmp.eq.s32.totalorder %s16, 24
      %p100 = por %p98, %p99
      %p102 = scmp.ne.s32.totalorder %s87, %s101
      %p103 = scmp.eq.s32.totalorder %s16, 0
      %p104 = por %p102, %p103
      %s106 = sadd.s32 %s105, 1
      %p109 = scmp.eq.s32.totalorder %s10, 24
      %p110 = scmp.ne.s32.totalorder %s105, %s107
      %p111 = scmp.eq.s32.totalorder %s10, 0
      %p112 = por %p110, %p111
      %p113 = scmp.ne.s32.totalorder %s105, %s107
      %p114 = scmp.eq.s32.totalorder %s15, 24
      %p115 = por %p113, %p114
      %p116 = scmp.ne.s32.totalorder %s107, %s108
      %p117 = scmp.eq.s32.totalorder %s15, 0
      %p118 = por %p116, %p117
      %p119 = scmp.ne.s32.totalorder %s107, %s108
      %p120 = scmp.eq.s32.totalorder %s16, 24
      %p121 = por %p119, %p120
      %p123 = scmp.ne.s32.totalorder %s108, %s122
      %p124 = scmp.eq.s32.totalorder %s16, 0
      %p125 = por %p123, %p124
      %s126 = ssub.s32 %s17, %s29
      %p127 = scmp.eq.s32.totalorder %s126, 0
      %s129 = sadd.s32 %s128, 1
      %s130 = scalar_select %p127, %s128, %s129
      %p133 = pneg %p127
      %p134 = scmp.eq.s32.totalorder %s10, 24
      %p135 = por %p133, %p134
      %p136 = scmp.ne.s32.totalorder %s128, %s131
      %p137 = scmp.eq.s32.totalorder %s10, 0
      %p138 = por %p136, %p137
      %p139 = scmp.ne.s32.totalorder %s128, %s131
      %p140 = scmp.eq.s32.totalorder %s15, 24
      %p141 = por %p139, %p140
      %p142 = scmp.ne.s32.totalorder %s131, %s132
      %p143 = scmp.eq.s32.totalorder %s15, 0
      %p144 = por %p142, %p143
      %p145 = scmp.ne.s32.totalorder %s131, %s132
      %p146 = scmp.eq.s32.totalorder %s16, 24
      %p147 = por %p145, %p146
      %p149 = scmp.ne.s32.totalorder %s132, %s148
      %p150 = scmp.eq.s32.totalorder %s16, 0
      %p151 = por %p149, %p150
      %p152 = scmp.le.s32.totalorder 1, %s10
      %p153 = scmp.lt.s32.totalorder %s10, 26
      %p154 = pnand %p152, %p153
      %p155 = pneg %p154
      // Predicated region
      $region9: #{gcn_clustering.2} parent=5 // pred_check
        _
      $region10: #{gcn_clustering.2} parent=5 // pred_check_branch
        %157 = sbr.rel (%p154) target = $region12
      $region11: #{gcn_clustering.2} parent=5 // pred_region
        %s158 = ssub.s32 %s10, 1
        // Predicated region
        $region13: #{gcn_clustering.2} parent=11 // pred_check
          %p159 = pneg %p97
        $region14: #{gcn_clustering.2} parent=11 // pred_check_branch
          %161 = sbr.rel (%p159) target = $region16
        $region15: #{gcn_clustering.2} parent=11 // pred_region
          _
        $region16: #{gcn_clustering.2} parent=11 // pred_fallthru
          _
        // Predicated region
        $region17: #{gcn_clustering.2} parent=11 // pred_check
          %p162 = pneg %p118
        $region18: #{gcn_clustering.2} parent=11 // pred_check_branch
          %164 = sbr.rel (%p162) target = $region20
        $region19: #{gcn_clustering.2} parent=11 // pred_region
          _
        $region20: #{gcn_clustering.2} parent=11 // pred_fallthru
          _
      $region12: #{gcn_clustering.2} parent=5 // pred_fallthru
        _
      %p165 = scmp.lt.s32.totalorder %s10, 25
      // Predicated region
      $region21: #{gcn_clustering.2} parent=5 // pred_check
        %p166 = pneg %p165
      $region22: #{gcn_clustering.2} parent=5 // pred_check_branch
        %168 = sbr.rel (%p166) target = $region24
      $region23: #{gcn_clustering.2} parent=5 // pred_region
        // Predicated region
        $region25: #{gcn_clustering.2} parent=23 // pred_check
          %p169 = pneg %p44
        $region26: #{gcn_clustering.2} parent=23 // pred_check_branch
          %171 = sbr.rel (%p169) target = $region28
        $region27: #{gcn_clustering.2} parent=23 // pred_region
          %s172 = sand.u32 %s34, 1
          %s173 = sand.u32 %s34, 1
          %s174 = smul.addr %s173, 64
          %s175 = scalar_lea.vmem [#allocation3], %s174
          %s176 = smul.u32 16, %s17
          %s177 = smul.addr %s176, 5
          %s178 = sadd.s32 %s18, %s177
          %s179 = smul.addr %s178, 4
          %s180 = scalar_lea.vmem %s0, %s179
          // Predicated region
          $region29: #{gcn_clustering.2} parent=27 // pred_check
            _
          $region30: #{gcn_clustering.2} parent=27 // pred_check_branch
            %182 = sbr.rel (0) target = $region32
          $region31: #{gcn_clustering.2} parent=27 // pred_region
            // Predicated region
            $region33: #{gcn_clustering.2} parent=31 // pred_check
              _
            $region34: #{gcn_clustering.2} parent=31 // pred_check_branch
              %184 = sbr.rel target = $region36
            $region35: #{gcn_clustering.2} parent=31 // pred_region
              // Predicated region
              $region48: #{gcn_clustering.2} parent=35 // pred_check
                _
              $region49: #{gcn_clustering.2} parent=35 // pred_check_branch
                %230 = sbr.rel (0) target = $region51
              $region50: #{gcn_clustering.2} parent=35 // pred_region
                loop: start=0, step=1, limit=1
                $region52: #{gcn_clustering.2} parent=50 // loop_pre_header
                  _
                $region53: #{gcn_clustering.2} parent=50 // loop_header
                  %s232 = sphi 0, %s236
                  %p233 = scmp.ge.s32.totalorder %s232, 1
                  %s237 = sphi %s180, %s180
                  %s238 = sphi %s175, %s175
                $region54: #{gcn_clustering.2} parent=50 // loop_header_branch
                  %235 = sbr.rel (%p233) target = $region58
                $region55: #{gcn_clustering.2} parent=50 // loop_body
                  _
                $region56: #{gcn_clustering.2} parent=50 // loop_footer
                  %s236 = sadd.s32 1, %s232
                $region57: #{gcn_clustering.2} parent=50 // loop_footer_branch
                  %231 = sbr.rel target = $region53
                $region58: #{gcn_clustering.2} parent=50 // loop_exit
                  _
                %s240 = ssub.s32 16, 1
                loop: start=0, step=1, limit=1
                $region59: #{gcn_clustering.2} parent=50 // loop_pre_header
                  _
                $region60: #{gcn_clustering.2} parent=50 // loop_header
                  %s242 = sphi 0, %s246
                  %p243 = scmp.ge.s32.totalorder %s242, 1
                  %s247 = sphi %s180, %s180
                  %s248 = sphi %s175, %s175
                $region61: #{gcn_clustering.2} parent=50 // loop_header_branch
                  %245 = sbr.rel (%p243) target = $region65
                $region62: #{gcn_clustering.2} parent=50 // loop_body
                  %v249 = vld [vmem:[%s247] sm:%s240]
                  %250 = vst [vmem:[%s248] sm:%s240] %v249
                  %v251 = vld [vmem:[%s247 + $0x14] sm:%s240]
                  %252 = vst [vmem:[%s248 + $0x4] sm:%s240] %v251
                  %v253 = vld [vmem:[%s247 + $0x28] sm:%s240]
                  %254 = vst [vmem:[%s248 + $0x8] sm:%s240] %v253
                  %v255 = vld [vmem:[%s247 + $0x3c] sm:%s240]
                  %256 = vst [vmem:[%s248 + $0xc] sm:%s240] %v255
                  %v257 = vld [vmem:[%s247 + $0x50] sm:%s240]
                  %258 = vst [vmem:[%s248 + $0x10] sm:%s240] %v257
                  %v259 = vld [vmem:[%s247 + $0x64] sm:%s240]
                  %260 = vst [vmem:[%s248 + $0x14] sm:%s240] %v259
                  %v261 = vld [vmem:[%s247 + $0x78] sm:%s240]
                  %262 = vst [vmem:[%s248 + $0x18] sm:%s240] %v261
                  %v263 = vld [vmem:[%s247 + $0x8c] sm:%s240]
                  %264 = vst [vmem:[%s248 + $0x1c] sm:%s240] %v263
                  %v265 = vld [vmem:[%s247 + $0xa0] sm:%s240]
                  %266 = vst [vmem:[%s248 + $0x20] sm:%s240] %v265
                  %v267 = vld [vmem:[%s247 + $0xb4] sm:%s240]
                  %268 = vst [vmem:[%s248 + $0x24] sm:%s240] %v267
                  %v269 = vld [vmem:[%s247 + $0xc8] sm:%s240]
                  %270 = vst [vmem:[%s248 + $0x28] sm:%s240] %v269
                  %v271 = vld [vmem:[%s247 + $0xdc] sm:%s240]
                  %272 = vst [vmem:[%s248 + $0x2c] sm:%s240] %v271
                  %v273 = vld [vmem:[%s247 + $0xf0] sm:%s240]
                  %274 = vst [vmem:[%s248 + $0x30] sm:%s240] %v273
                  %v275 = vld [vmem:[%s247 + $0x104] sm:%s240]
                  %276 = vst [vmem:[%s248 + $0x34] sm:%s240] %v275
                  %v277 = vld [vmem:[%s247 + $0x118] sm:%s240]
                  %278 = vst [vmem:[%s248 + $0x38] sm:%s240] %v277
                  %v279 = vld [vmem:[%s247 + $0x12c] sm:%s240]
                  %280 = vst [vmem:[%s248 + $0x3c] sm:%s240] %v279
                $region63: #{gcn_clustering.2} parent=50 // loop_footer
                  %s246 = sadd.s32 1, %s242
                $region64: #{gcn_clustering.2} parent=50 // loop_footer_branch
                  %241 = sbr.rel target = $region60
                $region65: #{gcn_clustering.2} parent=50 // loop_exit
                  _
              $region51: #{gcn_clustering.2} parent=35 // pred_fallthru
                _
            $region36: #{gcn_clustering.2} parent=31 // pred_fallthru
              _
            // Predicated region
            $region37: #{gcn_clustering.2} parent=31 // pred_check
              _
            $region38: #{gcn_clustering.2} parent=31 // pred_check_branch
              %186 = sbr.rel (0) target = $region40
            $region39: #{gcn_clustering.2} parent=31 // pred_region
              %s188 = ssub.s32 16, 1
              loop: start=0, step=1, limit=1
              $region41: #{gcn_clustering.2} parent=39 // loop_pre_header
                _
              $region42: #{gcn_clustering.2} parent=39 // loop_header
                %s190 = sphi 0, %s194
                %p191 = scmp.ge.s32.totalorder %s190, 1
                %s195 = sphi %s180, %s180
                %s196 = sphi %s175, %s175
              $region43: #{gcn_clustering.2} parent=39 // loop_header_branch
                %193 = sbr.rel (%p191) target = $region47
              $region44: #{gcn_clustering.2} parent=39 // loop_body
                %v197 = vld [vmem:[%s195] sm:%s188]
                %198 = vst [vmem:[%s196] sm:%s188] %v197
                %v199 = vld [vmem:[%s195 + $0x14] sm:%s188]
                %200 = vst [vmem:[%s196 + $0x4] sm:%s188] %v199
                %v201 = vld [vmem:[%s195 + $0x28] sm:%s188]
                %202 = vst [vmem:[%s196 + $0x8] sm:%s188] %v201
                %v203 = vld [vmem:[%s195 + $0x3c] sm:%s188]
                %204 = vst [vmem:[%s196 + $0xc] sm:%s188] %v203
                %v205 = vld [vmem:[%s195 + $0x50] sm:%s188]
                %206 = vst [vmem:[%s196 + $0x10] sm:%s188] %v205
                %v207 = vld [vmem:[%s195 + $0x64] sm:%s188]
                %208 = vst [vmem:[%s196 + $0x14] sm:%s188] %v207
                %v209 = vld [vmem:[%s195 + $0x78] sm:%s188]
                %210 = vst [vmem:[%s196 + $0x18] sm:%s188] %v209
                %v211 = vld [vmem:[%s195 + $0x8c] sm:%s188]
                %212 = vst [vmem:[%s196 + $0x1c] sm:%s188] %v211
                %v213 = vld [vmem:[%s195 + $0xa0] sm:%s188]
                %214 = vst [vmem:[%s196 + $0x20] sm:%s188] %v213
                %v215 = vld [vmem:[%s195 + $0xb4] sm:%s188]
                %216 = vst [vmem:[%s196 + $0x24] sm:%s188] %v215
                %v217 = vld [vmem:[%s195 + $0xc8] sm:%s188]
                %218 = vst [vmem:[%s196 + $0x28] sm:%s188] %v217
                %v219 = vld [vmem:[%s195 + $0xdc] sm:%s188]
                %220 = vst [vmem:[%s196 + $0x2c] sm:%s188] %v219
                %v221 = vld [vmem:[%s195 + $0xf0] sm:%s188]
                %222 = vst [vmem:[%s196 + $0x30] sm:%s188] %v221
                %v223 = vld [vmem:[%s195 + $0x104] sm:%s188]
                %224 = vst [vmem:[%s196 + $0x34] sm:%s188] %v223
                %v225 = vld [vmem:[%s195 + $0x118] sm:%s188]
                %226 = vst [vmem:[%s196 + $0x38] sm:%s188] %v225
                %v227 = vld [vmem:[%s195 + $0x12c] sm:%s188]
                %228 = vst [vmem:[%s196 + $0x3c] sm:%s188] %v227
              $region45: #{gcn_clustering.2} parent=39 // loop_footer
                %s194 = sadd.s32 1, %s190
              $region46: #{gcn_clustering.2} parent=39 // loop_footer_branch
                %189 = sbr.rel target = $region42
              $region47: #{gcn_clustering.2} parent=39 // loop_exit
                _
            $region40: #{gcn_clustering.2} parent=31 // pred_fallthru
              _
          $region32: #{gcn_clustering.2} parent=27 // pred_fallthru
            _
          %281 = vnop
        $region28: #{gcn_clustering.2} parent=23 // pred_fallthru
          _
        // Predicated region
        $region66: #{gcn_clustering.2} parent=23 // pred_check
          %p282 = pneg %p70
        $region67: #{gcn_clustering.2} parent=23 // pred_check_branch
          %284 = sbr.rel (%p282) target = $region69
        $region68: #{gcn_clustering.2} parent=23 // pred_region
          %s285 = smul.u32 16, %s18
          %p286 = scmp.lt.s32.totalorder %s285, 79
          %s287 = scalar_select %p286, %s285, 79
          %s288 = smul.addr %s287, 4
          %s289 = scalar_lea.vmem %s1, %s288
          %s290 = smul.u32 16, %s18
        $region69: #{gcn_clustering.2} parent=23 // pred_fallthru
          _
      $region24: #{gcn_clustering.2} parent=5 // pred_fallthru
        _
      %p291 = scmp.le.s32.totalorder 1, %s10
      %p292 = scmp.lt.s32.totalorder %s10, 26
      %p293 = pnand %p291, %p292
      %p294 = pneg %p293
      // Predicated region
      $region70: #{gcn_clustering.2} parent=5 // pred_check
        _
      $region71: #{gcn_clustering.2} parent=5 // pred_check_branch
        %296 = sbr.rel (%p293) target = $region73
      $region72: #{gcn_clustering.2} parent=5 // pred_region
        %s297 = ssub.s32 %s10, 1
        %s298 = sand.u32 %s37, 1
        %s299 = sand.u32 %s37, 1
        %s300 = smul.addr %s299, 64
        %s301 = scalar_lea.vmem [#allocation3], %s300
        // Predicated region
        $region74: #{gcn_clustering.2} parent=72 // pred_check
          %p302 = pneg %p50
        $region75: #{gcn_clustering.2} parent=72 // pred_check_branch
          %304 = sbr.rel (%p302) target = $region77
        $region76: #{gcn_clustering.2} parent=72 // pred_region
          _
        $region77: #{gcn_clustering.2} parent=72 // pred_fallthru
          _
        %s305 = sand.u32 %s37, 1
        %s306 = sand.u32 %s37, 1
        %s307 = smul.addr %s306, 64
        %s308 = scalar_lea.vmem [#allocation3], %s307
        %p309 = pneg %p50
        %p310 = pneg %p47
        %s311 = smul.u32 16, %s20
        %p312 = scmp.lt.s32.totalorder %s311, 79
        %s313 = scalar_select %p312, %s311, 79
        %s314 = smul.addr %s313, 4
        %s315 = scalar_lea.vmem %s1, %s314
        %p316 = pneg %p76
        %p317 = pneg %p73
        %p318 = pneg %p97
        %p319 = pneg %p94
        %p320 = pneg %p118
        %p321 = pneg %p115
        %p322 = pneg %p144
        %p323 = pneg %p141
        %s324 = smul.u32 16, %s19
        %p325 = scmp.lt.s32.totalorder %s324, 79
        %s326 = scalar_select %p325, %s324, 79
        %s327 = smul.addr %s326, 8
        %s328 = scalar_lea.vmem %s4, %s327
        %s329 = smul.u32 16, %s19
        %s330 = smul.u32 16, %s20
        %p331 = scmp.lt.s32.totalorder %s330, 79
        %s332 = scalar_select %p331, %s330, 79
        %s333 = smul.addr %s332, 4
        %s334 = scalar_lea.vmem %s1, %s333
        %s335 = smul.u32 16, %s20
        %s336 = smul.u32 16, %s19
        %p337 = scmp.lt.s32.totalorder %s336, 79
        %s338 = scalar_select %p337, %s336, 79
        %s339 = smul.addr %s338, 8
        %s340 = scalar_lea.vmem %s4, %s339
        %s341 = smul.u32 16, %s19
        %p342 = scmp.eq.s32.totalorder %s20, 0
        // Predicated region
        $region78: #{gcn_clustering.2} parent=72 // pred_check
          %p343 = pneg %p342
        $region79: #{gcn_clustering.2} parent=72 // pred_check_branch
          %345 = sbr.rel (%p343) target = $region81
        $region80: #{gcn_clustering.2} parent=72 // pred_region
          %346 = vst [vmem:[#allocation2] sm:$0xff] 0.0
          %347 = vst [vmem:[#allocation2 + $0x8] sm:$0xff] 0.0
          %348 = vst [vmem:[#allocation2 + $0x10] sm:$0xff] 0.0
          %349 = vst [vmem:[#allocation2 + $0x18] sm:$0xff] 0.0
          %350 = vst [vmem:[#allocation2 + $0x20] sm:$0xff] 0.0
          %351 = vst [vmem:[#allocation2 + $0x28] sm:$0xff] 0.0
          %352 = vst [vmem:[#allocation2 + $0x30] sm:$0xff] 0.0
          %353 = vst [vmem:[#allocation2 + $0x38] sm:$0xff] 0.0
          %354 = vst [vmem:[#allocation2 + $0x40] sm:$0xff] 0.0
          %355 = vst [vmem:[#allocation2 + $0x48] sm:$0xff] 0.0
          %356 = vst [vmem:[#allocation2 + $0x50] sm:$0xff] 0.0
          %357 = vst [vmem:[#allocation2 + $0x58] sm:$0xff] 0.0
          %358 = vst [vmem:[#allocation2 + $0x60] sm:$0xff] 0.0
          %359 = vst [vmem:[#allocation2 + $0x68] sm:$0xff] 0.0
          %360 = vst [vmem:[#allocation2 + $0x70] sm:$0xff] 0.0
          %361 = vst [vmem:[#allocation2 + $0x78] sm:$0xff] 0.0
        $region81: #{gcn_clustering.2} parent=72 // pred_fallthru
          _
        %v362 = vld [vmem:[#allocation2] sm:$0xff]
        %v363 = vld [vmem:[#allocation2 + $0x8] sm:$0xff]
        %v364 = vld [vmem:[#allocation2 + $0x10] sm:$0xff]
        %v365 = vld [vmem:[#allocation2 + $0x18] sm:$0xff]
        %v366 = vld [vmem:[#allocation2 + $0x20] sm:$0xff]
        %v367 = vld [vmem:[#allocation2 + $0x28] sm:$0xff]
        %v368 = vld [vmem:[#allocation2 + $0x30] sm:$0xff]
        %v369 = vld [vmem:[#allocation2 + $0x38] sm:$0xff]
        %v370 = vld [vmem:[#allocation2 + $0x40] sm:$0xff]
        %v371 = vld [vmem:[#allocation2 + $0x48] sm:$0xff]
        %v372 = vld [vmem:[#allocation2 + $0x50] sm:$0xff]
        %v373 = vld [vmem:[#allocation2 + $0x58] sm:$0xff]
        %v374 = vld [vmem:[#allocation2 + $0x60] sm:$0xff]
        %v375 = vld [vmem:[#allocation2 + $0x68] sm:$0xff]
        %v376 = vld [vmem:[#allocation2 + $0x70] sm:$0xff]
        %v377 = vld [vmem:[#allocation2 + $0x78] sm:$0xff]
        %v378 = vld [vmem:[%s301] sm:$0xf]
        %v379 = vld [vmem:[%s301 + $0x4] sm:$0xf]
        %v380 = vld [vmem:[%s301 + $0x8] sm:$0xf]
        %v381 = vld [vmem:[%s301 + $0xc] sm:$0xf]
        %v382 = vld [vmem:[%s301 + $0x10] sm:$0xf]
        %v383 = vld [vmem:[%s301 + $0x14] sm:$0xf]
        %v384 = vld [vmem:[%s301 + $0x18] sm:$0xf]
        %v385 = vld [vmem:[%s301 + $0x1c] sm:$0xf]
        %v386 = vld [vmem:[%s301 + $0x20] sm:$0xf]
        %v387 = vld [vmem:[%s301 + $0x24] sm:$0xf]
        %v388 = vld [vmem:[%s301 + $0x28] sm:$0xf]
        %v389 = vld [vmem:[%s301 + $0x2c] sm:$0xf]
        %v390 = vld [vmem:[%s301 + $0x30] sm:$0xf]
        %v391 = vld [vmem:[%s301 + $0x34] sm:$0xf]
        %v392 = vld [vmem:[%s301 + $0x38] sm:$0xf]
        %v393 = vld [vmem:[%s301 + $0x3c] sm:$0xf]
        %v394 = vld [vmem:[%s334] sm:$0xf]
        %v395 = vld [vmem:[%s334 + $0x4] sm:$0xf]
        %v396 = vld [vmem:[%s334 + $0x8] sm:$0xf]
        %v397 = vld [vmem:[%s334 + $0xc] sm:$0xf]
        %v398 = vld [vmem:[%s334 + $0x10] sm:$0xf]
        %v399 = vld [vmem:[%s334 + $0x14] sm:$0xf]
        %v400 = vld [vmem:[%s334 + $0x18] sm:$0xf]
        %v401 = vld [vmem:[%s334 + $0x1c] sm:$0xf]
        %v402 = vld [vmem:[%s334 + $0x20] sm:$0xf]
        %v403 = vld [vmem:[%s334 + $0x24] sm:$0xf]
        %v404 = vld [vmem:[%s334 + $0x28] sm:$0xf]
        %v405 = vld [vmem:[%s334 + $0x2c] sm:$0xf]
        %v406 = vld [vmem:[%s334 + $0x30] sm:$0xf]
        %v407 = vld [vmem:[%s334 + $0x34] sm:$0xf]
        %v408 = vld [vmem:[%s334 + $0x38] sm:$0xf]
        %v409 = vld [vmem:[%s334 + $0x3c] sm:$0xf]
        %v426 = vunpack.c.l.b16 %v378
        %v427 = vunpack.c.l.b16 %v379
        %v428 = vunpack.c.l.b16 %v380
        %v429 = vunpack.c.l.b16 %v381
        %v430 = vunpack.c.l.b16 %v382
        %v431 = vunpack.c.l.b16 %v383
        %v432 = vunpack.c.l.b16 %v384
        %v433 = vunpack.c.l.b16 %v385
        %v434 = vunpack.c.l.b16 %v386
        %v435 = vunpack.c.l.b16 %v387
        %v436 = vunpack.c.l.b16 %v388
        %v437 = vunpack.c.l.b16 %v389
        %v438 = vunpack.c.l.b16 %v390
        %v439 = vunpack.c.l.b16 %v391
        %v440 = vunpack.c.l.b16 %v392
        %v441 = vunpack.c.l.b16 %v393
        %v442 = vpack.c.b16 %v427, %v426
        %v443 = vpack.c.b16 %v429, %v428
        %v444 = vpack.c.b16 %v431, %v430
        %v445 = vpack.c.b16 %v433, %v432
        %v446 = vpack.c.b16 %v435, %v434
        %v447 = vpack.c.b16 %v437, %v436
        %v448 = vpack.c.b16 %v439, %v438
        %v449 = vpack.c.b16 %v441, %v440
        %v474 = vunpack.c.l.b16 %v394
        %v475 = vunpack.c.l.b16 %v395
        %v476 = vunpack.c.l.b16 %v396
        %v477 = vunpack.c.l.b16 %v397
        %v478 = vunpack.c.l.b16 %v398
        %v479 = vunpack.c.l.b16 %v399
        %v480 = vunpack.c.l.b16 %v400
        %v481 = vunpack.c.l.b16 %v401
        %v482 = vunpack.c.l.b16 %v402
        %v483 = vunpack.c.l.b16 %v403
        %v484 = vunpack.c.l.b16 %v404
        %v485 = vunpack.c.l.b16 %v405
        %v486 = vunpack.c.l.b16 %v406
        %v487 = vunpack.c.l.b16 %v407
        %v488 = vunpack.c.l.b16 %v408
        %v489 = vunpack.c.l.b16 %v409
        %v490 = vpack.c.b16 %v475, %v474
        %v491 = vpack.c.b16 %v477, %v476
        %v492 = vpack.c.b16 %v479, %v478
        %v493 = vpack.c.b16 %v481, %v480
        %v494 = vpack.c.b16 %v483, %v482
        %v495 = vpack.c.b16 %v485, %v484
        %v496 = vpack.c.b16 %v487, %v486
        %v497 = vpack.c.b16 %v489, %v488
        %506 = vmatpush.bf16.msra.mxu0 %v497
        %507 = vmatpush.bf16.msra.mxu0 %v496
        %508 = vmatpush.bf16.msra.mxu0 %v495
        %509 = vmatpush.bf16.msra.mxu0 %v494
        %510 = vmatpush.bf16.msra.mxu0 %v493
        %511 = vmatpush.bf16.msra.mxu0 %v492
        %512 = vmatpush.bf16.msra.mxu0 %v491
        %513 = vmatpush.bf16.msra.mxu0 %v490
        %514 = vmatmul.bf16.gmra.mxu0 %v442
        %v515 = vpop.f32.mrf.mxu0
        %v516 = vadd.f32 0.0, %v515
        %v517 = vpop.f32.mrf.mxu0
        %v518 = vadd.f32 0.0, %v517
        %519 = vmatmul.bf16.gmra.mxu0 %v443
        %v520 = vpop.f32.mrf.mxu0
        %v521 = vadd.f32 0.0, %v520
        %v522 = vpop.f32.mrf.mxu0
        %v523 = vadd.f32 0.0, %v522
        %524 = vmatmul.bf16.gmra.mxu0 %v444
        %v525 = vpop.f32.mrf.mxu0
        %v526 = vadd.f32 0.0, %v525
        %v527 = vpop.f32.mrf.mxu0
        %v528 = vadd.f32 0.0, %v527
        %529 = vmatmul.bf16.gmra.mxu0 %v445
        %v530 = vpop.f32.mrf.mxu0
        %v531 = vadd.f32 0.0, %v530
        %v532 = vpop.f32.mrf.mxu0
        %v533 = vadd.f32 0.0, %v532
        %534 = vmatmul.bf16.gmra.mxu0 %v446
        %v535 = vpop.f32.mrf.mxu0
        %v536 = vadd.f32 0.0, %v535
        %v537 = vpop.f32.mrf.mxu0
        %v538 = vadd.f32 0.0, %v537
        %539 = vmatmul.bf16.gmra.mxu0 %v447
        %v540 = vpop.f32.mrf.mxu0
        %v541 = vadd.f32 0.0, %v540
        %v542 = vpop.f32.mrf.mxu0
        %v543 = vadd.f32 0.0, %v542
        %544 = vmatmul.bf16.gmra.mxu0 %v448
        %v545 = vpop.f32.mrf.mxu0
        %v546 = vadd.f32 0.0, %v545
        %v547 = vpop.f32.mrf.mxu0
        %v548 = vadd.f32 0.0, %v547
        %549 = vmatmul.bf16.gmra.mxu0 %v449
        %v550 = vpop.f32.mrf.mxu0
        %v551 = vadd.f32 0.0, %v550
        %v552 = vpop.f32.mrf.mxu0
        %v553 = vadd.f32 0.0, %v552
        %554 = vdwg.mxu0
        %v555 = vadd.f32 %v362, %v516
        %v556 = vadd.f32 %v363, %v518
        %v557 = vadd.f32 %v364, %v521
        %v558 = vadd.f32 %v365, %v523
        %v559 = vadd.f32 %v366, %v526
        %v560 = vadd.f32 %v367, %v528
        %v561 = vadd.f32 %v368, %v531
        %v562 = vadd.f32 %v369, %v533
        %v563 = vadd.f32 %v370, %v536
        %v564 = vadd.f32 %v371, %v538
        %v565 = vadd.f32 %v372, %v541
        %v566 = vadd.f32 %v373, %v543
        %v567 = vadd.f32 %v374, %v546
        %v568 = vadd.f32 %v375, %v548
        %v569 = vadd.f32 %v376, %v551
        %v570 = vadd.f32 %v377, %v553
        %571 = vst [vmem:[#allocation2] sm:$0xff] %v555
        %572 = vst [vmem:[#allocation2 + $0x8] sm:$0xff] %v556
        %573 = vst [vmem:[#allocation2 + $0x10] sm:$0xff] %v557
        %574 = vst [vmem:[#allocation2 + $0x18] sm:$0xff] %v558
        %575 = vst [vmem:[#allocation2 + $0x20] sm:$0xff] %v559
        %576 = vst [vmem:[#allocation2 + $0x28] sm:$0xff] %v560
        %577 = vst [vmem:[#allocation2 + $0x30] sm:$0xff] %v561
        %578 = vst [vmem:[#allocation2 + $0x38] sm:$0xff] %v562
        %579 = vst [vmem:[#allocation2 + $0x40] sm:$0xff] %v563
        %580 = vst [vmem:[#allocation2 + $0x48] sm:$0xff] %v564
        %581 = vst [vmem:[#allocation2 + $0x50] sm:$0xff] %v565
        %582 = vst [vmem:[#allocation2 + $0x58] sm:$0xff] %v566
        %583 = vst [vmem:[#allocation2 + $0x60] sm:$0xff] %v567
        %584 = vst [vmem:[#allocation2 + $0x68] sm:$0xff] %v568
        %585 = vst [vmem:[#allocation2 + $0x70] sm:$0xff] %v569
        %586 = vst [vmem:[#allocation2 + $0x78] sm:$0xff] %v570
        %p587 = scmp.eq.s32.totalorder %s20, 4
        // Predicated region
        $region82: #{gcn_clustering.2} parent=72 // pred_check
          %p588 = pneg %p587
        $region83: #{gcn_clustering.2} parent=72 // pred_check_branch
          %590 = sbr.rel (%p588) target = $region85
        $region84: #{gcn_clustering.2} parent=72 // pred_region
          %v591 = vld [vmem:[#allocation2] sm:$0xff]
          %v592 = vld [vmem:[#allocation2 + $0x8] sm:$0xff]
          %v593 = vld [vmem:[#allocation2 + $0x10] sm:$0xff]
          %v594 = vld [vmem:[#allocation2 + $0x18] sm:$0xff]
          %v595 = vld [vmem:[#allocation2 + $0x20] sm:$0xff]
          %v596 = vld [vmem:[#allocation2 + $0x28] sm:$0xff]
          %v597 = vld [vmem:[#allocation2 + $0x30] sm:$0xff]
          %v598 = vld [vmem:[#allocation2 + $0x38] sm:$0xff]
          %v599 = vld [vmem:[#allocation2 + $0x40] sm:$0xff]
          %v600 = vld [vmem:[#allocation2 + $0x48] sm:$0xff]
          %v601 = vld [vmem:[#allocation2 + $0x50] sm:$0xff]
          %v602 = vld [vmem:[#allocation2 + $0x58] sm:$0xff]
          %v603 = vld [vmem:[#allocation2 + $0x60] sm:$0xff]
          %v604 = vld [vmem:[#allocation2 + $0x68] sm:$0xff]
          %v605 = vld [vmem:[#allocation2 + $0x70] sm:$0xff]
          %v606 = vld [vmem:[#allocation2 + $0x78] sm:$0xff]
          %v607 = vpack.c.bf16 %v592, %v591
          %v608 = vpack.c.bf16 %v594, %v593
          %v609 = vpack.c.bf16 %v596, %v595
          %v610 = vpack.c.bf16 %v598, %v597
          %v611 = vpack.c.bf16 %v600, %v599
          %v612 = vpack.c.bf16 %v602, %v601
          %v613 = vpack.c.bf16 %v604, %v603
          %v614 = vpack.c.bf16 %v606, %v605
          %v615 = vld [vmem:[%s2] sm:$0xf]
          %v616 = vld [vmem:[%s2 + $0x4] sm:$0xf]
          %v617 = vld [vmem:[%s2 + $0x8] sm:$0xf]
          %v618 = vld [vmem:[%s2 + $0xc] sm:$0xf]
          %v619 = vld [vmem:[%s2 + $0x10] sm:$0xf]
          %v620 = vld [vmem:[%s2 + $0x14] sm:$0xf]
          %v621 = vld [vmem:[%s2 + $0x18] sm:$0xf]
          %v622 = vld [vmem:[%s2 + $0x1c] sm:$0xf]
          %v623 = vld [vmem:[%s2 + $0x20] sm:$0xf]
          %v624 = vld [vmem:[%s2 + $0x24] sm:$0xf]
          %v625 = vld [vmem:[%s2 + $0x28] sm:$0xf]
          %v626 = vld [vmem:[%s2 + $0x2c] sm:$0xf]
          %v627 = vld [vmem:[%s2 + $0x30] sm:$0xf]
          %v628 = vld [vmem:[%s2 + $0x34] sm:$0xf]
          %v629 = vld [vmem:[%s2 + $0x38] sm:$0xf]
          %v630 = vld [vmem:[%s2 + $0x3c] sm:$0xf]
          %v631 = vld [vmem:[%s3] sm:$0x1]
          %v633 = vperm.slane %v631, 0
          %v651 = vunpack.c.l.b16 %v615
          %v652 = vunpack.c.l.b16 %v616
          %v653 = vunpack.c.l.b16 %v617
          %v654 = vunpack.c.l.b16 %v618
          %v655 = vunpack.c.l.b16 %v619
          %v656 = vunpack.c.l.b16 %v620
          %v657 = vunpack.c.l.b16 %v621
          %v658 = vunpack.c.l.b16 %v622
          %v659 = vunpack.c.l.b16 %v623
          %v660 = vunpack.c.l.b16 %v624
          %v661 = vunpack.c.l.b16 %v625
          %v662 = vunpack.c.l.b16 %v626
          %v663 = vunpack.c.l.b16 %v627
          %v664 = vunpack.c.l.b16 %v628
          %v665 = vunpack.c.l.b16 %v629
          %v666 = vunpack.c.l.b16 %v630
          %v667 = vpack.c.b16 %v652, %v651
          %v668 = vpack.c.b16 %v654, %v653
          %v669 = vpack.c.b16 %v656, %v655
          %v670 = vpack.c.b16 %v658, %v657
          %v671 = vpack.c.b16 %v660, %v659
          %v672 = vpack.c.b16 %v662, %v661
          %v673 = vpack.c.b16 %v664, %v663
          %v674 = vpack.c.b16 %v666, %v665
          %683 = vmatpush.bf16.msra.mxu0 %v674
          %684 = vmatpush.bf16.msra.mxu0 %v673
          %685 = vmatpush.bf16.msra.mxu0 %v672
          %686 = vmatpush.bf16.msra.mxu0 %v671
          %687 = vmatpush.bf16.msra.mxu0 %v670
          %688 = vmatpush.bf16.msra.mxu0 %v669
          %689 = vmatpush.bf16.msra.mxu0 %v668
          %690 = vmatpush.bf16.msra.mxu0 %v667
          %691 = vmatmul.bf16.gmra.mxu0 %v607
          %v692 = vpop.f32.mrf.mxu0
          %v693 = vadd.f32 %v633, %v692
          %v694 = vpop.f32.mrf.mxu0
          %v695 = vadd.f32 %v633, %v694
          %696 = vmatmul.bf16.gmra.mxu0 %v608
          %v697 = vpop.f32.mrf.mxu0
          %v698 = vadd.f32 %v633, %v697
          %v699 = vpop.f32.mrf.mxu0
          %v700 = vadd.f32 %v633, %v699
          %701 = vmatmul.bf16.gmra.mxu0 %v609
          %v702 = vpop.f32.mrf.mxu0
          %v703 = vadd.f32 %v633, %v702
          %v704 = vpop.f32.mrf.mxu0
          %v705 = vadd.f32 %v633, %v704
          %706 = vmatmul.bf16.gmra.mxu0 %v610
          %v707 = vpop.f32.mrf.mxu0
          %v708 = vadd.f32 %v633, %v707
          %v709 = vpop.f32.mrf.mxu0
          %v710 = vadd.f32 %v633, %v709
          %711 = vmatmul.bf16.gmra.mxu0 %v611
          %v712 = vpop.f32.mrf.mxu0
          %v713 = vadd.f32 %v633, %v712
          %v714 = vpop.f32.mrf.mxu0
          %v715 = vadd.f32 %v633, %v714
          %716 = vmatmul.bf16.gmra.mxu0 %v612
          %v717 = vpop.f32.mrf.mxu0
          %v718 = vadd.f32 %v633, %v717
          %v719 = vpop.f32.mrf.mxu0
          %v720 = vadd.f32 %v633, %v719
          %721 = vmatmul.bf16.gmra.mxu0 %v613
          %v722 = vpop.f32.mrf.mxu0
          %v723 = vadd.f32 %v633, %v722
          %v724 = vpop.f32.mrf.mxu0
          %v725 = vadd.f32 %v633, %v724
          %726 = vmatmul.bf16.gmra.mxu0 %v614
          %v727 = vpop.f32.mrf.mxu0
          %v728 = vadd.f32 %v633, %v727
          %v729 = vpop.f32.mrf.mxu0
          %v730 = vadd.f32 %v633, %v729
          %731 = vdwg.mxu0
          %v732 = vmax.f32 %v693, 0.0
          %v733 = vmax.f32 %v695, 0.0
          %v734 = vmax.f32 %v698, 0.0
          %v735 = vmax.f32 %v700, 0.0
          %v736 = vmax.f32 %v703, 0.0
          %v737 = vmax.f32 %v705, 0.0
          %v738 = vmax.f32 %v708, 0.0
          %v739 = vmax.f32 %v710, 0.0
          %v740 = vmax.f32 %v713, 0.0
          %v741 = vmax.f32 %v715, 0.0
          %v742 = vmax.f32 %v718, 0.0
          %v743 = vmax.f32 %v720, 0.0
          %v744 = vmax.f32 %v723, 0.0
          %v745 = vmax.f32 %v725, 0.0
          %v746 = vmax.f32 %v728, 0.0
          %v747 = vmax.f32 %v730, 0.0
          %748 = vst [vmem:[%s340] sm:$0xff] %v732
          %749 = vst [vmem:[%s340 + $0x8] sm:$0xff] %v733
          %750 = vst [vmem:[%s340 + $0x10] sm:$0xff] %v734
          %751 = vst [vmem:[%s340 + $0x18] sm:$0xff] %v735
          %752 = vst [vmem:[%s340 + $0x20] sm:$0xff] %v736
          %753 = vst [vmem:[%s340 + $0x28] sm:$0xff] %v737
          %754 = vst [vmem:[%s340 + $0x30] sm:$0xff] %v738
          %755 = vst [vmem:[%s340 + $0x38] sm:$0xff] %v739
          %756 = vst [vmem:[%s340 + $0x40] sm:$0xff] %v740
          %757 = vst [vmem:[%s340 + $0x48] sm:$0xff] %v741
          %758 = vst [vmem:[%s340 + $0x50] sm:$0xff] %v742
          %759 = vst [vmem:[%s340 + $0x58] sm:$0xff] %v743
          %760 = vst [vmem:[%s340 + $0x60] sm:$0xff] %v744
          %761 = vst [vmem:[%s340 + $0x68] sm:$0xff] %v745
          %762 = vst [vmem:[%s340 + $0x70] sm:$0xff] %v746
          %763 = vst [vmem:[%s340 + $0x78] sm:$0xff] %v747
        $region85: #{gcn_clustering.2} parent=72 // pred_fallthru
          _
        %s764 = smul.u32 16, %s19
        %p765 = scmp.lt.s32.totalorder %s764, 79
        %s766 = scalar_select %p765, %s764, 79
        %s767 = smul.addr %s766, 8
        %s768 = scalar_lea.vmem %s4, %s767
        // Predicated region
        $region86: #{gcn_clustering.2} parent=72 // pred_check
          %p769 = pneg %p141
        $region87: #{gcn_clustering.2} parent=72 // pred_check_branch
          %771 = sbr.rel (%p769) target = $region89
        $region88: #{gcn_clustering.2} parent=72 // pred_region
          %s772 = smul.u32 16, %s19
        $region89: #{gcn_clustering.2} parent=72 // pred_fallthru
          _
      $region73: #{gcn_clustering.2} parent=5 // pred_fallthru
        _
      %p773 = scmp.le.s32.totalorder 2, %s10
      // Predicated region
      $region90: #{gcn_clustering.2} parent=5 // pred_check
        %p774 = pneg %p773
      $region91: #{gcn_clustering.2} parent=5 // pred_check_branch
        %776 = sbr.rel (%p774) target = $region93
      $region92: #{gcn_clustering.2} parent=5 // pred_region
        %s777 = ssub.s32 %s10, 2
        // Predicated region
        $region94: #{gcn_clustering.2} parent=92 // pred_check
          %p778 = pneg %p147
        $region95: #{gcn_clustering.2} parent=92 // pred_check_branch
          %780 = sbr.rel (%p778) target = $region97
        $region96: #{gcn_clustering.2} parent=92 // pred_region
          %s781 = smul.u32 16, %s21
          %p782 = scmp.lt.s32.totalorder %s781, 79
          %s783 = scalar_select %p782, %s781, 79
          %s784 = smul.addr %s783, 8
          %s785 = scalar_lea.vmem %s4, %s784
        $region97: #{gcn_clustering.2} parent=92 // pred_fallthru
          _
      $region93: #{gcn_clustering.2} parent=5 // pred_fallthru
        _
    $region6: #{gcn_clustering.2} parent=1 // loop_footer
      %s14 = sadd.s32 1, %s10
    $region7: #{gcn_clustering.2} parent=1 // loop_footer_branch
      %9 = sbr.rel target = $region3
    $region8: #{gcn_clustering.2} parent=1 // loop_exit
      _

// kernel: gcn_clustering.3
$region0: #{gcn_clustering.3}
  #allocation0 [shape = 'u32[]', space=smem, size = 0x4, offset = 0x4, fixed_abs, tag = 'smem constant byte address 0x4 - core index']
  #allocation1 [shape = 'u32[72,128]{1,0:T(1,128)}', space=vmem, size = 0x9000, scoped, tag = 'internal scratch']
  #allocation2 [shape = 'f32[128,128]{1,0:T(8,128)}', space=vmem, size = 0x10000, scoped, tag = 'scratch operand']
  %s0 = inlined_call_operand.vmem [shape: bf16[640,640], index: 0, kind: input, shape index: {}]
  %s1 = inlined_call_operand.vmem [shape: bf16[640,128], index: 1, kind: input, shape index: {}]
  %s2 = inlined_call_operand.vmem [shape: bf16[128,128], index: 2, kind: input, shape index: {}]
  %s3 = inlined_call_operand.vmem [shape: f32[1,128], index: 3, kind: input, shape index: {}]
  %s4 = inlined_call_operand.vmem [shape: f32[640,128], index: 4, kind: output, shape index: {}]
  %s5 = sld [smem:[#allocation0]]
  $region98: #{gcn_clustering.3} parent=0
    _
  %s7 = ssub.s32 1, %s5
  %s8 = scalar_select 0, %s7, %s5
  $region1: #{gcn_clustering.3} parent=0
    #allocation3 [shape = 'u8[65536]{0}', space=vmem, size = 0x10000, scoped, tag = 'input window, operand 0']
    loop: start=0, step=1, limit=27
    $region2: #{gcn_clustering.3} parent=1 // loop_pre_header
      _
    $region3: #{gcn_clustering.3} parent=1 // loop_header
      %s10 = sphi 0, %s14
      %p11 = scmp.ge.s32.totalorder %s10, 27
      %s17 = sphi 0, %s29
      %s18 = sphi 0, %s25
      %s19 = sphi 0, %s17
      %s20 = sphi 0, %s18
      %s21 = sphi 0, %s19
      %s22 = sphi 0, %s20
      %s34 = sphi 0, %s36
      %s37 = sphi 0, %s34
      %s38 = sphi 0, %s37
      %s54 = sphi 0, %s38
      %s60 = sphi 0, %s62
      %s63 = sphi 0, %s60
      %s64 = sphi 0, %s63
      %s80 = sphi 0, %s64
      %s84 = sphi 0, %s84
      %s86 = sphi 0, %s84
      %s87 = sphi 0, %s86
      %s101 = sphi 0, %s87
      %s105 = sphi 0, %s105
      %s107 = sphi 0, %s105
      %s108 = sphi 0, %s107
      %s122 = sphi 0, %s108
      %s128 = sphi 0, %s130
      %s131 = sphi 0, %s128
      %s132 = sphi 0, %s131
      %s148 = sphi 0, %s132
    $region4: #{gcn_clustering.3} parent=1 // loop_header_branch
      %13 = sbr.rel (%p11) target = $region8
    $region5: #{gcn_clustering.3} parent=1 // loop_body
      %s15 = ssub.s32 %s10, 1
      %s16 = ssub.s32 %s10, 2
      %s23 = sadd.s32 1, %s18
      %p24 = scmp.ge.s32.totalorder %s23, 5
      %s25 = scalar_select %p24, 0, %s23
      %s26 = sadd.s32 1, %s17
      %s27 = scalar_select %p24, %s26, %s17
      %p28 = scmp.ge.s32.totalorder %s27, 5
      %s29 = scalar_select %p28, 0, %s27
      %s30 = ssub.s32 %s17, %s29
      %s31 = ssub.s32 %s18, %s25
      %s32 = sor.u32 %s30, %s31
      %p33 = scmp.eq.s32.totalorder %s32, 0
      %s35 = sadd.s32 %s34, 1
      %s36 = scalar_select %p33, %s34, %s35
      %p39 = pneg %p33
      %p40 = scmp.eq.s32.totalorder %s10, 24
      %p41 = por %p39, %p40
      %p42 = scmp.ne.s32.totalorder %s34, %s37
      %p43 = scmp.eq.s32.totalorder %s10, 0
      %p44 = por %p42, %p43
      %p45 = scmp.ne.s32.totalorder %s34, %s37
      %p46 = scmp.eq.s32.totalorder %s15, 24
      %p47 = por %p45, %p46
      %p48 = scmp.ne.s32.totalorder %s37, %s38
      %p49 = scmp.eq.s32.totalorder %s15, 0
      %p50 = por %p48, %p49
      %p51 = scmp.ne.s32.totalorder %s37, %s38
      %p52 = scmp.eq.s32.totalorder %s16, 24
      %p53 = por %p51, %p52
      %p55 = scmp.ne.s32.totalorder %s38, %s54
      %p56 = scmp.eq.s32.totalorder %s16, 0
      %p57 = por %p55, %p56
      %s58 = ssub.s32 %s18, %s25
      %p59 = scmp.eq.s32.totalorder %s58, 0
      %s61 = sadd.s32 %s60, 1
      %s62 = scalar_select %p59, %s60, %s61
      %p65 = pneg %p59
      %p66 = scmp.eq.s32.totalorder %s10, 24
      %p67 = por %p65, %p66
      %p68 = scmp.ne.s32.totalorder %s60, %s63
      %p69 = scmp.eq.s32.totalorder %s10, 0
      %p70 = por %p68, %p69
      %p71 = scmp.ne.s32.totalorder %s60, %s63
      %p72 = scmp.eq.s32.totalorder %s15, 24
      %p73 = por %p71, %p72
      %p74 = scmp.ne.s32.totalorder %s63, %s64
      %p75 = scmp.eq.s32.totalorder %s15, 0
      %p76 = por %p74, %p75
      %p77 = scmp.ne.s32.totalorder %s63, %s64
      %p78 = scmp.eq.s32.totalorder %s16, 24
      %p79 = por %p77, %p78
      %p81 = scmp.ne.s32.totalorder %s64, %s80
      %p82 = scmp.eq.s32.totalorder %s16, 0
      %p83 = por %p81, %p82
      %s85 = sadd.s32 %s84, 1
      %p88 = scmp.eq.s32.totalorder %s10, 24
      %p89 = scmp.ne.s32.totalorder %s84, %s86
      %p90 = scmp.eq.s32.totalorder %s10, 0
      %p91 = por %p89, %p90
      %p92 = scmp.ne.s32.totalorder %s84, %s86
      %p93 = scmp.eq.s32.totalorder %s15, 24
      %p94 = por %p92, %p93
      %p95 = scmp.ne.s32.totalorder %s86, %s87
      %p96 = scmp.eq.s32.totalorder %s15, 0
      %p97 = por %p95, %p96
      %p98 = scmp.ne.s32.totalorder %s86, %s87
      %p99 = scmp.eq.s32.totalorder %s16, 24
      %p100 = por %p98, %p99
      %p102 = scmp.ne.s32.totalorder %s87, %s101
      %p103 = scmp.eq.s32.totalorder %s16, 0
      %p104 = por %p102, %p103
      %s106 = sadd.s32 %s105, 1
      %p109 = scmp.eq.s32.totalorder %s10, 24
      %p110 = scmp.ne.s32.totalorder %s105, %s107
      %p111 = scmp.eq.s32.totalorder %s10, 0
      %p112 = por %p110, %p111
      %p113 = scmp.ne.s32.totalorder %s105, %s107
      %p114 = scmp.eq.s32.totalorder %s15, 24
      %p115 = por %p113, %p114
      %p116 = scmp.ne.s32.totalorder %s107, %s108
      %p117 = scmp.eq.s32.totalorder %s15, 0
      %p118 = por %p116, %p117
      %p119 = scmp.ne.s32.totalorder %s107, %s108
      %p120 = scmp.eq.s32.totalorder %s16, 24
      %p121 = por %p119, %p120
      %p123 = scmp.ne.s32.totalorder %s108, %s122
      %p124 = scmp.eq.s32.totalorder %s16, 0
      %p125 = por %p123, %p124
      %s126 = ssub.s32 %s17, %s29
      %p127 = scmp.eq.s32.totalorder %s126, 0
      %s129 = sadd.s32 %s128, 1
      %s130 = scalar_select %p127, %s128, %s129
      %p133 = pneg %p127
      %p134 = scmp.eq.s32.totalorder %s10, 24
      %p135 = por %p133, %p134
      %p136 = scmp.ne.s32.totalorder %s128, %s131
      %p137 = scmp.eq.s32.totalorder %s10, 0
      %p138 = por %p136, %p137
      %p139 = scmp.ne.s32.totalorder %s128, %s131
      %p140 = scmp.eq.s32.totalorder %s15, 24
      %p141 = por %p139, %p140
      %p142 = scmp.ne.s32.totalorder %s131, %s132
      %p143 = scmp.eq.s32.totalorder %s15, 0
      %p144 = por %p142, %p143
      %p145 = scmp.ne.s32.totalorder %s131, %s132
      %p146 = scmp.eq.s32.totalorder %s16, 24
      %p147 = por %p145, %p146
      %p149 = scmp.ne.s32.totalorder %s132, %s148
      %p150 = scmp.eq.s32.totalorder %s16, 0
      %p151 = por %p149, %p150
      %p152 = scmp.le.s32.totalorder 1, %s10
      %p153 = scmp.lt.s32.totalorder %s10, 26
      %p154 = pnand %p152, %p153
      %p155 = pneg %p154
      // Predicated region
      $region9: #{gcn_clustering.3} parent=5 // pred_check
        _
      $region10: #{gcn_clustering.3} parent=5 // pred_check_branch
        %157 = sbr.rel (%p154) target = $region12
      $region11: #{gcn_clustering.3} parent=5 // pred_region
        %s158 = ssub.s32 %s10, 1
        // Predicated region
        $region13: #{gcn_clustering.3} parent=11 // pred_check
          %p159 = pneg %p97
        $region14: #{gcn_clustering.3} parent=11 // pred_check_branch
          %161 = sbr.rel (%p159) target = $region16
        $region15: #{gcn_clustering.3} parent=11 // pred_region
          _
        $region16: #{gcn_clustering.3} parent=11 // pred_fallthru
          _
        // Predicated region
        $region17: #{gcn_clustering.3} parent=11 // pred_check
          %p162 = pneg %p118
        $region18: #{gcn_clustering.3} parent=11 // pred_check_branch
          %164 = sbr.rel (%p162) target = $region20
        $region19: #{gcn_clustering.3} parent=11 // pred_region
          _
        $region20: #{gcn_clustering.3} parent=11 // pred_fallthru
          _
      $region12: #{gcn_clustering.3} parent=5 // pred_fallthru
        _
      %p165 = scmp.lt.s32.totalorder %s10, 25
      // Predicated region
      $region21: #{gcn_clustering.3} parent=5 // pred_check
        %p166 = pneg %p165
      $region22: #{gcn_clustering.3} parent=5 // pred_check_branch
        %168 = sbr.rel (%p166) target = $region24
      $region23: #{gcn_clustering.3} parent=5 // pred_region
        // Predicated region
        $region25: #{gcn_clustering.3} parent=23 // pred_check
          %p169 = pneg %p44
        $region26: #{gcn_clustering.3} parent=23 // pred_check_branch
          %171 = sbr.rel (%p169) target = $region28
        $region27: #{gcn_clustering.3} parent=23 // pred_region
          %s172 = sand.u32 %s34, 1
          %s173 = sand.u32 %s34, 1
          %s174 = smul.addr %s173, 64
          %s175 = scalar_lea.vmem [#allocation3], %s174
          %s176 = smul.u32 16, %s17
          %s177 = smul.addr %s176, 5
          %s178 = sadd.s32 %s18, %s177
          %s179 = smul.addr %s178, 4
          %s180 = scalar_lea.vmem %s0, %s179
          // Predicated region
          $region29: #{gcn_clustering.3} parent=27 // pred_check
            _
          $region30: #{gcn_clustering.3} parent=27 // pred_check_branch
            %182 = sbr.rel (0) target = $region32
          $region31: #{gcn_clustering.3} parent=27 // pred_region
            // Predicated region
            $region33: #{gcn_clustering.3} parent=31 // pred_check
              _
            $region34: #{gcn_clustering.3} parent=31 // pred_check_branch
              %184 = sbr.rel target = $region36
            $region35: #{gcn_clustering.3} parent=31 // pred_region
              // Predicated region
              $region48: #{gcn_clustering.3} parent=35 // pred_check
                _
              $region49: #{gcn_clustering.3} parent=35 // pred_check_branch
                %230 = sbr.rel (0) target = $region51
              $region50: #{gcn_clustering.3} parent=35 // pred_region
                loop: start=0, step=1, limit=1
                $region52: #{gcn_clustering.3} parent=50 // loop_pre_header
                  _
                $region53: #{gcn_clustering.3} parent=50 // loop_header
                  %s232 = sphi 0, %s236
                  %p233 = scmp.ge.s32.totalorder %s232, 1
                  %s237 = sphi %s180, %s180
                  %s238 = sphi %s175, %s175
                $region54: #{gcn_clustering.3} parent=50 // loop_header_branch
                  %235 = sbr.rel (%p233) target = $region58
                $region55: #{gcn_clustering.3} parent=50 // loop_body
                  _
                $region56: #{gcn_clustering.3} parent=50 // loop_footer
                  %s236 = sadd.s32 1, %s232
                $region57: #{gcn_clustering.3} parent=50 // loop_footer_branch
                  %231 = sbr.rel target = $region53
                $region58: #{gcn_clustering.3} parent=50 // loop_exit
                  _
                %s240 = ssub.s32 16, 1
                loop: start=0, step=1, limit=1
                $region59: #{gcn_clustering.3} parent=50 // loop_pre_header
                  _
                $region60: #{gcn_clustering.3} parent=50 // loop_header
                  %s242 = sphi 0, %s246
                  %p243 = scmp.ge.s32.totalorder %s242, 1
                  %s247 = sphi %s180, %s180
                  %s248 = sphi %s175, %s175
                $region61: #{gcn_clustering.3} parent=50 // loop_header_branch
                  %245 = sbr.rel (%p243) target = $region65
                $region62: #{gcn_clustering.3} parent=50 // loop_body
                  %v249 = vld [vmem:[%s247] sm:%s240]
                  %250 = vst [vmem:[%s248] sm:%s240] %v249
                  %v251 = vld [vmem:[%s247 + $0x14] sm:%s240]
                  %252 = vst [vmem:[%s248 + $0x4] sm:%s240] %v251
                  %v253 = vld [vmem:[%s247 + $0x28] sm:%s240]
                  %254 = vst [vmem:[%s248 + $0x8] sm:%s240] %v253
                  %v255 = vld [vmem:[%s247 + $0x3c] sm:%s240]
                  %256 = vst [vmem:[%s248 + $0xc] sm:%s240] %v255
                  %v257 = vld [vmem:[%s247 + $0x50] sm:%s240]
                  %258 = vst [vmem:[%s248 + $0x10] sm:%s240] %v257
                  %v259 = vld [vmem:[%s247 + $0x64] sm:%s240]
                  %260 = vst [vmem:[%s248 + $0x14] sm:%s240] %v259
                  %v261 = vld [vmem:[%s247 + $0x78] sm:%s240]
                  %262 = vst [vmem:[%s248 + $0x18] sm:%s240] %v261
                  %v263 = vld [vmem:[%s247 + $0x8c] sm:%s240]
                  %264 = vst [vmem:[%s248 + $0x1c] sm:%s240] %v263
                  %v265 = vld [vmem:[%s247 + $0xa0] sm:%s240]
                  %266 = vst [vmem:[%s248 + $0x20] sm:%s240] %v265
                  %v267 = vld [vmem:[%s247 + $0xb4] sm:%s240]
                  %268 = vst [vmem:[%s248 + $0x24] sm:%s240] %v267
                  %v269 = vld [vmem:[%s247 + $0xc8] sm:%s240]
                  %270 = vst [vmem:[%s248 + $0x28] sm:%s240] %v269
                  %v271 = vld [vmem:[%s247 + $0xdc] sm:%s240]
                  %272 = vst [vmem:[%s248 + $0x2c] sm:%s240] %v271
                  %v273 = vld [vmem:[%s247 + $0xf0] sm:%s240]
                  %274 = vst [vmem:[%s248 + $0x30] sm:%s240] %v273
                  %v275 = vld [vmem:[%s247 + $0x104] sm:%s240]
                  %276 = vst [vmem:[%s248 + $0x34] sm:%s240] %v275
                  %v277 = vld [vmem:[%s247 + $0x118] sm:%s240]
                  %278 = vst [vmem:[%s248 + $0x38] sm:%s240] %v277
                  %v279 = vld [vmem:[%s247 + $0x12c] sm:%s240]
                  %280 = vst [vmem:[%s248 + $0x3c] sm:%s240] %v279
                $region63: #{gcn_clustering.3} parent=50 // loop_footer
                  %s246 = sadd.s32 1, %s242
                $region64: #{gcn_clustering.3} parent=50 // loop_footer_branch
                  %241 = sbr.rel target = $region60
                $region65: #{gcn_clustering.3} parent=50 // loop_exit
                  _
              $region51: #{gcn_clustering.3} parent=35 // pred_fallthru
                _
            $region36: #{gcn_clustering.3} parent=31 // pred_fallthru
              _
            // Predicated region
            $region37: #{gcn_clustering.3} parent=31 // pred_check
              _
            $region38: #{gcn_clustering.3} parent=31 // pred_check_branch
              %186 = sbr.rel (0) target = $region40
            $region39: #{gcn_clustering.3} parent=31 // pred_region
              %s188 = ssub.s32 16, 1
              loop: start=0, step=1, limit=1
              $region41: #{gcn_clustering.3} parent=39 // loop_pre_header
                _
              $region42: #{gcn_clustering.3} parent=39 // loop_header
                %s190 = sphi 0, %s194
                %p191 = scmp.ge.s32.totalorder %s190, 1
                %s195 = sphi %s180, %s180
                %s196 = sphi %s175, %s175
              $region43: #{gcn_clustering.3} parent=39 // loop_header_branch
                %193 = sbr.rel (%p191) target = $region47
              $region44: #{gcn_clustering.3} parent=39 // loop_body
                %v197 = vld [vmem:[%s195] sm:%s188]
                %198 = vst [vmem:[%s196] sm:%s188] %v197
                %v199 = vld [vmem:[%s195 + $0x14] sm:%s188]
                %200 = vst [vmem:[%s196 + $0x4] sm:%s188] %v199
                %v201 = vld [vmem:[%s195 + $0x28] sm:%s188]
                %202 = vst [vmem:[%s196 + $0x8] sm:%s188] %v201
                %v203 = vld [vmem:[%s195 + $0x3c] sm:%s188]
                %204 = vst [vmem:[%s196 + $0xc] sm:%s188] %v203
                %v205 = vld [vmem:[%s195 + $0x50] sm:%s188]
                %206 = vst [vmem:[%s196 + $0x10] sm:%s188] %v205
                %v207 = vld [vmem:[%s195 + $0x64] sm:%s188]
                %208 = vst [vmem:[%s196 + $0x14] sm:%s188] %v207
                %v209 = vld [vmem:[%s195 + $0x78] sm:%s188]
                %210 = vst [vmem:[%s196 + $0x18] sm:%s188] %v209
                %v211 = vld [vmem:[%s195 + $0x8c] sm:%s188]
                %212 = vst [vmem:[%s196 + $0x1c] sm:%s188] %v211
                %v213 = vld [vmem:[%s195 + $0xa0] sm:%s188]
                %214 = vst [vmem:[%s196 + $0x20] sm:%s188] %v213
                %v215 = vld [vmem:[%s195 + $0xb4] sm:%s188]
                %216 = vst [vmem:[%s196 + $0x24] sm:%s188] %v215
                %v217 = vld [vmem:[%s195 + $0xc8] sm:%s188]
                %218 = vst [vmem:[%s196 + $0x28] sm:%s188] %v217
                %v219 = vld [vmem:[%s195 + $0xdc] sm:%s188]
                %220 = vst [vmem:[%s196 + $0x2c] sm:%s188] %v219
                %v221 = vld [vmem:[%s195 + $0xf0] sm:%s188]
                %222 = vst [vmem:[%s196 + $0x30] sm:%s188] %v221
                %v223 = vld [vmem:[%s195 + $0x104] sm:%s188]
                %224 = vst [vmem:[%s196 + $0x34] sm:%s188] %v223
                %v225 = vld [vmem:[%s195 + $0x118] sm:%s188]
                %226 = vst [vmem:[%s196 + $0x38] sm:%s188] %v225
                %v227 = vld [vmem:[%s195 + $0x12c] sm:%s188]
                %228 = vst [vmem:[%s196 + $0x3c] sm:%s188] %v227
              $region45: #{gcn_clustering.3} parent=39 // loop_footer
                %s194 = sadd.s32 1, %s190
              $region46: #{gcn_clustering.3} parent=39 // loop_footer_branch
                %189 = sbr.rel target = $region42
              $region47: #{gcn_clustering.3} parent=39 // loop_exit
                _
            $region40: #{gcn_clustering.3} parent=31 // pred_fallthru
              _
          $region32: #{gcn_clustering.3} parent=27 // pred_fallthru
            _
          %281 = vnop
        $region28: #{gcn_clustering.3} parent=23 // pred_fallthru
          _
        // Predicated region
        $region66: #{gcn_clustering.3} parent=23 // pred_check
          %p282 = pneg %p70
        $region67: #{gcn_clustering.3} parent=23 // pred_check_branch
          %284 = sbr.rel (%p282) target = $region69
        $region68: #{gcn_clustering.3} parent=23 // pred_region
          %s285 = smul.u32 16, %s18
          %p286 = scmp.lt.s32.totalorder %s285, 79
          %s287 = scalar_select %p286, %s285, 79
          %s288 = smul.addr %s287, 4
          %s289 = scalar_lea.vmem %s1, %s288
          %s290 = smul.u32 16, %s18
        $region69: #{gcn_clustering.3} parent=23 // pred_fallthru
          _
      $region24: #{gcn_clustering.3} parent=5 // pred_fallthru
        _
      %p291 = scmp.le.s32.totalorder 1, %s10
      %p292 = scmp.lt.s32.totalorder %s10, 26
      %p293 = pnand %p291, %p292
      %p294 = pneg %p293
      // Predicated region
      $region70: #{gcn_clustering.3} parent=5 // pred_check
        _
      $region71: #{gcn_clustering.3} parent=5 // pred_check_branch
        %296 = sbr.rel (%p293) target = $region73
      $region72: #{gcn_clustering.3} parent=5 // pred_region
        %s297 = ssub.s32 %s10, 1
        %s298 = sand.u32 %s37, 1
        %s299 = sand.u32 %s37, 1
        %s300 = smul.addr %s299, 64
        %s301 = scalar_lea.vmem [#allocation3], %s300
        // Predicated region
        $region74: #{gcn_clustering.3} parent=72 // pred_check
          %p302 = pneg %p50
        $region75: #{gcn_clustering.3} parent=72 // pred_check_branch
          %304 = sbr.rel (%p302) target = $region77
        $region76: #{gcn_clustering.3} parent=72 // pred_region
          _
        $region77: #{gcn_clustering.3} parent=72 // pred_fallthru
          _
        %s305 = sand.u32 %s37, 1
        %s306 = sand.u32 %s37, 1
        %s307 = smul.addr %s306, 64
        %s308 = scalar_lea.vmem [#allocation3], %s307
        %p309 = pneg %p50
        %p310 = pneg %p47
        %s311 = smul.u32 16, %s20
        %p312 = scmp.lt.s32.totalorder %s311, 79
        %s313 = scalar_select %p312, %s311, 79
        %s314 = smul.addr %s313, 4
        %s315 = scalar_lea.vmem %s1, %s314
        %p316 = pneg %p76
        %p317 = pneg %p73
        %p318 = pneg %p97
        %p319 = pneg %p94
        %p320 = pneg %p118
        %p321 = pneg %p115
        %p322 = pneg %p144
        %p323 = pneg %p141
        %s324 = smul.u32 16, %s19
        %p325 = scmp.lt.s32.totalorder %s324, 79
        %s326 = scalar_select %p325, %s324, 79
        %s327 = smul.addr %s326, 8
        %s328 = scalar_lea.vmem %s4, %s327
        %s329 = smul.u32 16, %s19
        %s330 = smul.u32 16, %s20
        %p331 = scmp.lt.s32.totalorder %s330, 79
        %s332 = scalar_select %p331, %s330, 79
        %s333 = smul.addr %s332, 4
        %s334 = scalar_lea.vmem %s1, %s333
        %s335 = smul.u32 16, %s20
        %s336 = smul.u32 16, %s19
        %p337 = scmp.lt.s32.totalorder %s336, 79
        %s338 = scalar_select %p337, %s336, 79
        %s339 = smul.addr %s338, 8
        %s340 = scalar_lea.vmem %s4, %s339
        %s341 = smul.u32 16, %s19
        %p342 = scmp.eq.s32.totalorder %s20, 0
        // Predicated region
        $region78: #{gcn_clustering.3} parent=72 // pred_check
          %p343 = pneg %p342
        $region79: #{gcn_clustering.3} parent=72 // pred_check_branch
          %345 = sbr.rel (%p343) target = $region81
        $region80: #{gcn_clustering.3} parent=72 // pred_region
          %346 = vst [vmem:[#allocation2] sm:$0xff] 0.0
          %347 = vst [vmem:[#allocation2 + $0x8] sm:$0xff] 0.0
          %348 = vst [vmem:[#allocation2 + $0x10] sm:$0xff] 0.0
          %349 = vst [vmem:[#allocation2 + $0x18] sm:$0xff] 0.0
          %350 = vst [vmem:[#allocation2 + $0x20] sm:$0xff] 0.0
          %351 = vst [vmem:[#allocation2 + $0x28] sm:$0xff] 0.0
          %352 = vst [vmem:[#allocation2 + $0x30] sm:$0xff] 0.0
          %353 = vst [vmem:[#allocation2 + $0x38] sm:$0xff] 0.0
          %354 = vst [vmem:[#allocation2 + $0x40] sm:$0xff] 0.0
          %355 = vst [vmem:[#allocation2 + $0x48] sm:$0xff] 0.0
          %356 = vst [vmem:[#allocation2 + $0x50] sm:$0xff] 0.0
          %357 = vst [vmem:[#allocation2 + $0x58] sm:$0xff] 0.0
          %358 = vst [vmem:[#allocation2 + $0x60] sm:$0xff] 0.0
          %359 = vst [vmem:[#allocation2 + $0x68] sm:$0xff] 0.0
          %360 = vst [vmem:[#allocation2 + $0x70] sm:$0xff] 0.0
          %361 = vst [vmem:[#allocation2 + $0x78] sm:$0xff] 0.0
        $region81: #{gcn_clustering.3} parent=72 // pred_fallthru
          _
        %v362 = vld [vmem:[#allocation2] sm:$0xff]
        %v363 = vld [vmem:[#allocation2 + $0x8] sm:$0xff]
        %v364 = vld [vmem:[#allocation2 + $0x10] sm:$0xff]
        %v365 = vld [vmem:[#allocation2 + $0x18] sm:$0xff]
        %v366 = vld [vmem:[#allocation2 + $0x20] sm:$0xff]
        %v367 = vld [vmem:[#allocation2 + $0x28] sm:$0xff]
        %v368 = vld [vmem:[#allocation2 + $0x30] sm:$0xff]
        %v369 = vld [vmem:[#allocation2 + $0x38] sm:$0xff]
        %v370 = vld [vmem:[#allocation2 + $0x40] sm:$0xff]
        %v371 = vld [vmem:[#allocation2 + $0x48] sm:$0xff]
        %v372 = vld [vmem:[#allocation2 + $0x50] sm:$0xff]
        %v373 = vld [vmem:[#allocation2 + $0x58] sm:$0xff]
        %v374 = vld [vmem:[#allocation2 + $0x60] sm:$0xff]
        %v375 = vld [vmem:[#allocation2 + $0x68] sm:$0xff]
        %v376 = vld [vmem:[#allocation2 + $0x70] sm:$0xff]
        %v377 = vld [vmem:[#allocation2 + $0x78] sm:$0xff]
        %v378 = vld [vmem:[%s301] sm:$0xf]
        %v379 = vld [vmem:[%s301 + $0x4] sm:$0xf]
        %v380 = vld [vmem:[%s301 + $0x8] sm:$0xf]
        %v381 = vld [vmem:[%s301 + $0xc] sm:$0xf]
        %v382 = vld [vmem:[%s301 + $0x10] sm:$0xf]
        %v383 = vld [vmem:[%s301 + $0x14] sm:$0xf]
        %v384 = vld [vmem:[%s301 + $0x18] sm:$0xf]
        %v385 = vld [vmem:[%s301 + $0x1c] sm:$0xf]
        %v386 = vld [vmem:[%s301 + $0x20] sm:$0xf]
        %v387 = vld [vmem:[%s301 + $0x24] sm:$0xf]
        %v388 = vld [vmem:[%s301 + $0x28] sm:$0xf]
        %v389 = vld [vmem:[%s301 + $0x2c] sm:$0xf]
        %v390 = vld [vmem:[%s301 + $0x30] sm:$0xf]
        %v391 = vld [vmem:[%s301 + $0x34] sm:$0xf]
        %v392 = vld [vmem:[%s301 + $0x38] sm:$0xf]
        %v393 = vld [vmem:[%s301 + $0x3c] sm:$0xf]
        %v394 = vld [vmem:[%s334] sm:$0xf]
        %v395 = vld [vmem:[%s334 + $0x4] sm:$0xf]
        %v396 = vld [vmem:[%s334 + $0x8] sm:$0xf]
        %v397 = vld [vmem:[%s334 + $0xc] sm:$0xf]
        %v398 = vld [vmem:[%s334 + $0x10] sm:$0xf]
        %v399 = vld [vmem:[%s334 + $0x14] sm:$0xf]
        %v400 = vld [vmem:[%s334 + $0x18] sm:$0xf]
        %v401 = vld [vmem:[%s334 + $0x1c] sm:$0xf]
        %v402 = vld [vmem:[%s334 + $0x20] sm:$0xf]
        %v403 = vld [vmem:[%s334 + $0x24] sm:$0xf]
        %v404 = vld [vmem:[%s334 + $0x28] sm:$0xf]
        %v405 = vld [vmem:[%s334 + $0x2c] sm:$0xf]
        %v406 = vld [vmem:[%s334 + $0x30] sm:$0xf]
        %v407 = vld [vmem:[%s334 + $0x34] sm:$0xf]
        %v408 = vld [vmem:[%s334 + $0x38] sm:$0xf]
        %v409 = vld [vmem:[%s334 + $0x3c] sm:$0xf]
        %v426 = vunpack.c.l.b16 %v378
        %v427 = vunpack.c.l.b16 %v379
        %v428 = vunpack.c.l.b16 %v380
        %v429 = vunpack.c.l.b16 %v381
        %v430 = vunpack.c.l.b16 %v382
        %v431 = vunpack.c.l.b16 %v383
        %v432 = vunpack.c.l.b16 %v384
        %v433 = vunpack.c.l.b16 %v385
        %v434 = vunpack.c.l.b16 %v386
        %v435 = vunpack.c.l.b16 %v387
        %v436 = vunpack.c.l.b16 %v388
        %v437 = vunpack.c.l.b16 %v389
        %v438 = vunpack.c.l.b16 %v390
        %v439 = vunpack.c.l.b16 %v391
        %v440 = vunpack.c.l.b16 %v392
        %v441 = vunpack.c.l.b16 %v393
        %v442 = vpack.c.b16 %v427, %v426
        %v443 = vpack.c.b16 %v429, %v428
        %v444 = vpack.c.b16 %v431, %v430
        %v445 = vpack.c.b16 %v433, %v432
        %v446 = vpack.c.b16 %v435, %v434
        %v447 = vpack.c.b16 %v437, %v436
        %v448 = vpack.c.b16 %v439, %v438
        %v449 = vpack.c.b16 %v441, %v440
        %v474 = vunpack.c.l.b16 %v394
        %v475 = vunpack.c.l.b16 %v395
        %v476 = vunpack.c.l.b16 %v396
        %v477 = vunpack.c.l.b16 %v397
        %v478 = vunpack.c.l.b16 %v398
        %v479 = vunpack.c.l.b16 %v399
        %v480 = vunpack.c.l.b16 %v400
        %v481 = vunpack.c.l.b16 %v401
        %v482 = vunpack.c.l.b16 %v402
        %v483 = vunpack.c.l.b16 %v403
        %v484 = vunpack.c.l.b16 %v404
        %v485 = vunpack.c.l.b16 %v405
        %v486 = vunpack.c.l.b16 %v406
        %v487 = vunpack.c.l.b16 %v407
        %v488 = vunpack.c.l.b16 %v408
        %v489 = vunpack.c.l.b16 %v409
        %v490 = vpack.c.b16 %v475, %v474
        %v491 = vpack.c.b16 %v477, %v476
        %v492 = vpack.c.b16 %v479, %v478
        %v493 = vpack.c.b16 %v481, %v480
        %v494 = vpack.c.b16 %v483, %v482
        %v495 = vpack.c.b16 %v485, %v484
        %v496 = vpack.c.b16 %v487, %v486
        %v497 = vpack.c.b16 %v489, %v488
        %506 = vmatpush.bf16.msra.mxu0 %v497
        %507 = vmatpush.bf16.msra.mxu0 %v496
        %508 = vmatpush.bf16.msra.mxu0 %v495
        %509 = vmatpush.bf16.msra.mxu0 %v494
        %510 = vmatpush.bf16.msra.mxu0 %v493
        %511 = vmatpush.bf16.msra.mxu0 %v492
        %512 = vmatpush.bf16.msra.mxu0 %v491
        %513 = vmatpush.bf16.msra.mxu0 %v490
        %514 = vmatmul.bf16.gmra.mxu0 %v442
        %v515 = vpop.f32.mrf.mxu0
        %v516 = vadd.f32 0.0, %v515
        %v517 = vpop.f32.mrf.mxu0
        %v518 = vadd.f32 0.0, %v517
        %519 = vmatmul.bf16.gmra.mxu0 %v443
        %v520 = vpop.f32.mrf.mxu0
        %v521 = vadd.f32 0.0, %v520
        %v522 = vpop.f32.mrf.mxu0
        %v523 = vadd.f32 0.0, %v522
        %524 = vmatmul.bf16.gmra.mxu0 %v444
        %v525 = vpop.f32.mrf.mxu0
        %v526 = vadd.f32 0.0, %v525
        %v527 = vpop.f32.mrf.mxu0
        %v528 = vadd.f32 0.0, %v527
        %529 = vmatmul.bf16.gmra.mxu0 %v445
        %v530 = vpop.f32.mrf.mxu0
        %v531 = vadd.f32 0.0, %v530
        %v532 = vpop.f32.mrf.mxu0
        %v533 = vadd.f32 0.0, %v532
        %534 = vmatmul.bf16.gmra.mxu0 %v446
        %v535 = vpop.f32.mrf.mxu0
        %v536 = vadd.f32 0.0, %v535
        %v537 = vpop.f32.mrf.mxu0
        %v538 = vadd.f32 0.0, %v537
        %539 = vmatmul.bf16.gmra.mxu0 %v447
        %v540 = vpop.f32.mrf.mxu0
        %v541 = vadd.f32 0.0, %v540
        %v542 = vpop.f32.mrf.mxu0
        %v543 = vadd.f32 0.0, %v542
        %544 = vmatmul.bf16.gmra.mxu0 %v448
        %v545 = vpop.f32.mrf.mxu0
        %v546 = vadd.f32 0.0, %v545
        %v547 = vpop.f32.mrf.mxu0
        %v548 = vadd.f32 0.0, %v547
        %549 = vmatmul.bf16.gmra.mxu0 %v449
        %v550 = vpop.f32.mrf.mxu0
        %v551 = vadd.f32 0.0, %v550
        %v552 = vpop.f32.mrf.mxu0
        %v553 = vadd.f32 0.0, %v552
        %554 = vdwg.mxu0
        %v555 = vadd.f32 %v362, %v516
        %v556 = vadd.f32 %v363, %v518
        %v557 = vadd.f32 %v364, %v521
        %v558 = vadd.f32 %v365, %v523
        %v559 = vadd.f32 %v366, %v526
        %v560 = vadd.f32 %v367, %v528
        %v561 = vadd.f32 %v368, %v531
        %v562 = vadd.f32 %v369, %v533
        %v563 = vadd.f32 %v370, %v536
        %v564 = vadd.f32 %v371, %v538
        %v565 = vadd.f32 %v372, %v541
        %v566 = vadd.f32 %v373, %v543
        %v567 = vadd.f32 %v374, %v546
        %v568 = vadd.f32 %v375, %v548
        %v569 = vadd.f32 %v376, %v551
        %v570 = vadd.f32 %v377, %v553
        %571 = vst [vmem:[#allocation2] sm:$0xff] %v555
        %572 = vst [vmem:[#allocation2 + $0x8] sm:$0xff] %v556
        %573 = vst [vmem:[#allocation2 + $0x10] sm:$0xff] %v557
        %574 = vst [vmem:[#allocation2 + $0x18] sm:$0xff] %v558
        %575 = vst [vmem:[#allocation2 + $0x20] sm:$0xff] %v559
        %576 = vst [vmem:[#allocation2 + $0x28] sm:$0xff] %v560
        %577 = vst [vmem:[#allocation2 + $0x30] sm:$0xff] %v561
        %578 = vst [vmem:[#allocation2 + $0x38] sm:$0xff] %v562
        %579 = vst [vmem:[#allocation2 + $0x40] sm:$0xff] %v563
        %580 = vst [vmem:[#allocation2 + $0x48] sm:$0xff] %v564
        %581 = vst [vmem:[#allocation2 + $0x50] sm:$0xff] %v565
        %582 = vst [vmem:[#allocation2 + $0x58] sm:$0xff] %v566
        %583 = vst [vmem:[#allocation2 + $0x60] sm:$0xff] %v567
        %584 = vst [vmem:[#allocation2 + $0x68] sm:$0xff] %v568
        %585 = vst [vmem:[#allocation2 + $0x70] sm:$0xff] %v569
        %586 = vst [vmem:[#allocation2 + $0x78] sm:$0xff] %v570
        %p587 = scmp.eq.s32.totalorder %s20, 4
        // Predicated region
        $region82: #{gcn_clustering.3} parent=72 // pred_check
          %p588 = pneg %p587
        $region83: #{gcn_clustering.3} parent=72 // pred_check_branch
          %590 = sbr.rel (%p588) target = $region85
        $region84: #{gcn_clustering.3} parent=72 // pred_region
          %v591 = vld [vmem:[#allocation2] sm:$0xff]
          %v592 = vld [vmem:[#allocation2 + $0x8] sm:$0xff]
          %v593 = vld [vmem:[#allocation2 + $0x10] sm:$0xff]
          %v594 = vld [vmem:[#allocation2 + $0x18] sm:$0xff]
          %v595 = vld [vmem:[#allocation2 + $0x20] sm:$0xff]
          %v596 = vld [vmem:[#allocation2 + $0x28] sm:$0xff]
          %v597 = vld [vmem:[#allocation2 + $0x30] sm:$0xff]
          %v598 = vld [vmem:[#allocation2 + $0x38] sm:$0xff]
          %v599 = vld [vmem:[#allocation2 + $0x40] sm:$0xff]
          %v600 = vld [vmem:[#allocation2 + $0x48] sm:$0xff]
          %v601 = vld [vmem:[#allocation2 + $0x50] sm:$0xff]
          %v602 = vld [vmem:[#allocation2 + $0x58] sm:$0xff]
          %v603 = vld [vmem:[#allocation2 + $0x60] sm:$0xff]
          %v604 = vld [vmem:[#allocation2 + $0x68] sm:$0xff]
          %v605 = vld [vmem:[#allocation2 + $0x70] sm:$0xff]
          %v606 = vld [vmem:[#allocation2 + $0x78] sm:$0xff]
          %v607 = vpack.c.bf16 %v592, %v591
          %v608 = vpack.c.bf16 %v594, %v593
          %v609 = vpack.c.bf16 %v596, %v595
          %v610 = vpack.c.bf16 %v598, %v597
          %v611 = vpack.c.bf16 %v600, %v599
          %v612 = vpack.c.bf16 %v602, %v601
          %v613 = vpack.c.bf16 %v604, %v603
          %v614 = vpack.c.bf16 %v606, %v605
          %v615 = vld [vmem:[%s2] sm:$0xf]
          %v616 = vld [vmem:[%s2 + $0x4] sm:$0xf]
          %v617 = vld [vmem:[%s2 + $0x8] sm:$0xf]
          %v618 = vld [vmem:[%s2 + $0xc] sm:$0xf]
          %v619 = vld [vmem:[%s2 + $0x10] sm:$0xf]
          %v620 = vld [vmem:[%s2 + $0x14] sm:$0xf]
          %v621 = vld [vmem:[%s2 + $0x18] sm:$0xf]
          %v622 = vld [vmem:[%s2 + $0x1c] sm:$0xf]
          %v623 = vld [vmem:[%s2 + $0x20] sm:$0xf]
          %v624 = vld [vmem:[%s2 + $0x24] sm:$0xf]
          %v625 = vld [vmem:[%s2 + $0x28] sm:$0xf]
          %v626 = vld [vmem:[%s2 + $0x2c] sm:$0xf]
          %v627 = vld [vmem:[%s2 + $0x30] sm:$0xf]
          %v628 = vld [vmem:[%s2 + $0x34] sm:$0xf]
          %v629 = vld [vmem:[%s2 + $0x38] sm:$0xf]
          %v630 = vld [vmem:[%s2 + $0x3c] sm:$0xf]
          %v631 = vld [vmem:[%s3] sm:$0x1]
          %v633 = vperm.slane %v631, 0
          %v651 = vunpack.c.l.b16 %v615
          %v652 = vunpack.c.l.b16 %v616
          %v653 = vunpack.c.l.b16 %v617
          %v654 = vunpack.c.l.b16 %v618
          %v655 = vunpack.c.l.b16 %v619
          %v656 = vunpack.c.l.b16 %v620
          %v657 = vunpack.c.l.b16 %v621
          %v658 = vunpack.c.l.b16 %v622
          %v659 = vunpack.c.l.b16 %v623
          %v660 = vunpack.c.l.b16 %v624
          %v661 = vunpack.c.l.b16 %v625
          %v662 = vunpack.c.l.b16 %v626
          %v663 = vunpack.c.l.b16 %v627
          %v664 = vunpack.c.l.b16 %v628
          %v665 = vunpack.c.l.b16 %v629
          %v666 = vunpack.c.l.b16 %v630
          %v667 = vpack.c.b16 %v652, %v651
          %v668 = vpack.c.b16 %v654, %v653
          %v669 = vpack.c.b16 %v656, %v655
          %v670 = vpack.c.b16 %v658, %v657
          %v671 = vpack.c.b16 %v660, %v659
          %v672 = vpack.c.b16 %v662, %v661
          %v673 = vpack.c.b16 %v664, %v663
          %v674 = vpack.c.b16 %v666, %v665
          %683 = vmatpush.bf16.msra.mxu0 %v674
          %684 = vmatpush.bf16.msra.mxu0 %v673
          %685 = vmatpush.bf16.msra.mxu0 %v672
          %686 = vmatpush.bf16.msra.mxu0 %v671
          %687 = vmatpush.bf16.msra.mxu0 %v670
          %688 = vmatpush.bf16.msra.mxu0 %v669
          %689 = vmatpush.bf16.msra.mxu0 %v668
          %690 = vmatpush.bf16.msra.mxu0 %v667
          %691 = vmatmul.bf16.gmra.mxu0 %v607
          %v692 = vpop.f32.mrf.mxu0
          %v693 = vadd.f32 %v633, %v692
          %v694 = vpop.f32.mrf.mxu0
          %v695 = vadd.f32 %v633, %v694
          %696 = vmatmul.bf16.gmra.mxu0 %v608
          %v697 = vpop.f32.mrf.mxu0
          %v698 = vadd.f32 %v633, %v697
          %v699 = vpop.f32.mrf.mxu0
          %v700 = vadd.f32 %v633, %v699
          %701 = vmatmul.bf16.gmra.mxu0 %v609
          %v702 = vpop.f32.mrf.mxu0
          %v703 = vadd.f32 %v633, %v702
          %v704 = vpop.f32.mrf.mxu0
          %v705 = vadd.f32 %v633, %v704
          %706 = vmatmul.bf16.gmra.mxu0 %v610
          %v707 = vpop.f32.mrf.mxu0
          %v708 = vadd.f32 %v633, %v707
          %v709 = vpop.f32.mrf.mxu0
          %v710 = vadd.f32 %v633, %v709
          %711 = vmatmul.bf16.gmra.mxu0 %v611
          %v712 = vpop.f32.mrf.mxu0
          %v713 = vadd.f32 %v633, %v712
          %v714 = vpop.f32.mrf.mxu0
          %v715 = vadd.f32 %v633, %v714
          %716 = vmatmul.bf16.gmra.mxu0 %v612
          %v717 = vpop.f32.mrf.mxu0
          %v718 = vadd.f32 %v633, %v717
          %v719 = vpop.f32.mrf.mxu0
          %v720 = vadd.f32 %v633, %v719
          %721 = vmatmul.bf16.gmra.mxu0 %v613
          %v722 = vpop.f32.mrf.mxu0
          %v723 = vadd.f32 %v633, %v722
          %v724 = vpop.f32.mrf.mxu0
          %v725 = vadd.f32 %v633, %v724
          %726 = vmatmul.bf16.gmra.mxu0 %v614
          %v727 = vpop.f32.mrf.mxu0
          %v728 = vadd.f32 %v633, %v727
          %v729 = vpop.f32.mrf.mxu0
          %v730 = vadd.f32 %v633, %v729
          %731 = vdwg.mxu0
          %732 = vst [vmem:[%s340] sm:$0xff] %v693
          %733 = vst [vmem:[%s340 + $0x8] sm:$0xff] %v695
          %734 = vst [vmem:[%s340 + $0x10] sm:$0xff] %v698
          %735 = vst [vmem:[%s340 + $0x18] sm:$0xff] %v700
          %736 = vst [vmem:[%s340 + $0x20] sm:$0xff] %v703
          %737 = vst [vmem:[%s340 + $0x28] sm:$0xff] %v705
          %738 = vst [vmem:[%s340 + $0x30] sm:$0xff] %v708
          %739 = vst [vmem:[%s340 + $0x38] sm:$0xff] %v710
          %740 = vst [vmem:[%s340 + $0x40] sm:$0xff] %v713
          %741 = vst [vmem:[%s340 + $0x48] sm:$0xff] %v715
          %742 = vst [vmem:[%s340 + $0x50] sm:$0xff] %v718
          %743 = vst [vmem:[%s340 + $0x58] sm:$0xff] %v720
          %744 = vst [vmem:[%s340 + $0x60] sm:$0xff] %v723
          %745 = vst [vmem:[%s340 + $0x68] sm:$0xff] %v725
          %746 = vst [vmem:[%s340 + $0x70] sm:$0xff] %v728
          %747 = vst [vmem:[%s340 + $0x78] sm:$0xff] %v730
        $region85: #{gcn_clustering.3} parent=72 // pred_fallthru
          _
        %s748 = smul.u32 16, %s19
        %p749 = scmp.lt.s32.totalorder %s748, 79
        %s750 = scalar_select %p749, %s748, 79
        %s751 = smul.addr %s750, 8
        %s752 = scalar_lea.vmem %s4, %s751
        // Predicated region
        $region86: #{gcn_clustering.3} parent=72 // pred_check
          %p753 = pneg %p141
        $region87: #{gcn_clustering.3} parent=72 // pred_check_branch
          %755 = sbr.rel (%p753) target = $region89
        $region88: #{gcn_clustering.3} parent=72 // pred_region
          %s756 = smul.u32 16, %s19
        $region89: #{gcn_clustering.3} parent=72 // pred_fallthru
          _
      $region73: #{gcn_clustering.3} parent=5 // pred_fallthru
        _
      %p757 = scmp.le.s32.totalorder 2, %s10
      // Predicated region
      $region90: #{gcn_clustering.3} parent=5 // pred_check
        %p758 = pneg %p757
      $region91: #{gcn_clustering.3} parent=5 // pred_check_branch
        %760 = sbr.rel (%p758) target = $region93
      $region92: #{gcn_clustering.3} parent=5 // pred_region
        %s761 = ssub.s32 %s10, 2
        // Predicated region
        $region94: #{gcn_clustering.3} parent=92 // pred_check
          %p762 = pneg %p147
        $region95: #{gcn_clustering.3} parent=92 // pred_check_branch
          %764 = sbr.rel (%p762) target = $region97
        $region96: #{gcn_clustering.3} parent=92 // pred_region
          %s765 = smul.u32 16, %s21
          %p766 = scmp.lt.s32.totalorder %s765, 79
          %s767 = scalar_select %p766, %s765, 79
          %s768 = smul.addr %s767, 8
          %s769 = scalar_lea.vmem %s4, %s768
        $region97: #{gcn_clustering.3} parent=92 // pred_fallthru
          _
      $region93: #{gcn_clustering.3} parent=5 // pred_fallthru
        _
    $region6: #{gcn_clustering.3} parent=1 // loop_footer
      %s14 = sadd.s32 1, %s10
    $region7: #{gcn_clustering.3} parent=1 // loop_footer_branch
      %9 = sbr.rel target = $region3
    $region8: #{gcn_clustering.3} parent=1 // loop_exit
      _

</llo_original>
